<compile_context>
chip_gen: v7x
topology: tpu7x:2x2x1
jax: 0.10.0
libtpu: 0.0.40
codegen_flags: <defaults>
</compile_context>

<pallas_src>
import jax
import jax.numpy as jnp
from jax import lax
from jax.experimental import pallas as pl
from jax.experimental.pallas import tpu as pltpu


# ----------------------------------------------------------------------------
# Fused LSTM kernel
# ----------------------------------------------------------------------------
def _encoder_lstm_kernel(x_ref, len_ref, h0_ref, c0_ref, wih_ref, whh_ref,
                         b_ref, hn_ref, cn_ref, xp_ref):
    """Single-layer, length-masked LSTM over one padded batch tile.

    x_ref:   (S*Bt, E)    time-major rows: row t*Bt + b = timestep t, batch b
    len_ref: (Bt, 1)      int32 valid lengths (0 for padded rows)
    h0_ref:  (Bt, Hp)     initial hidden (padded lanes are zero)
    c0_ref:  (Bt, Hp)     initial cell   (padded lanes are zero)
    wih_ref: (E, 4*Hp)    gate-block-padded input weights   [i|f|g|o]
    whh_ref: (Hp, 4*Hp)   gate-block-padded recurrent weights
    b_ref:   (1, 4*Hp)    combined bias (b_ih + b_hh), gate-block padded
    hn_ref, cn_ref: (Bt, Hp) final hidden / cell state
    xp_ref:  (S*Bt, 4*Hp) VMEM scratch holding the hoisted input projection
    """
    Bt, Hp = h0_ref.shape
    S = x_ref.shape[0] // Bt

    # Hoisted input projection: one big MXU matmul off the sequential chain,
    # bias folded in here (not re-broadcast every timestep).
    xp_ref[...] = (
        jnp.dot(x_ref[...], wih_ref[...], preferred_element_type=jnp.float32)
        + b_ref[...])

    lens = len_ref[...]            # (Bt, 1) int32, loaded once
    whh = whh_ref[...]             # (Hp, 4*Hp), loaded once

    def step(t, carry):
        h, c = carry               # live in vregs, never round-trip via refs
        row = pl.multiple_of(t * Bt, Bt)
        gates = xp_ref[pl.ds(row, Bt), :] + jnp.dot(
            h, whh, preferred_element_type=jnp.float32)
        # Gate blocks are padded to 128 lanes -> every slice is vreg-aligned.
        i_g = jax.nn.sigmoid(gates[:, 0 * Hp:1 * Hp])
        f_g = jax.nn.sigmoid(gates[:, 1 * Hp:2 * Hp])
        g_g = jnp.tanh(gates[:, 2 * Hp:3 * Hp])
        o_g = jax.nn.sigmoid(gates[:, 3 * Hp:4 * Hp])
        c_new = f_g * c + i_g * g_g
        h_new = o_g * jnp.tanh(c_new)
        upd = t < lens             # (Bt, 1) mask == packed-sequence semantics
        return jnp.where(upd, h_new, h), jnp.where(upd, c_new, c)

    h, c = lax.fori_loop(0, S, step, (h0_ref[...], c0_ref[...]), unroll=True)
    hn_ref[...] = h                # single lane-dense (Bt, 128) store
    cn_ref[...] = c


# ----------------------------------------------------------------------------
# Wrapper (padding / layout plumbing + pallas_call)
# ----------------------------------------------------------------------------
def _round_up(n, m):
    return (n + m - 1) // m * m


def init_encoder_lstm_params(key, input_size, hidden_size):
    """nn.LSTM default init: U(-1/sqrt(H), 1/sqrt(H)) for all weights/biases."""
    k = 1.0 / (hidden_size ** 0.5)
    ks = jax.random.split(key, 4)

    def u(kk, shape):
        return jax.random.uniform(kk, shape, jnp.float32, -k, k)

    return {
        "weight_ih": u(ks[0], (4 * hidden_size, input_size)),   # PyTorch layout
        "weight_hh": u(ks[1], (4 * hidden_size, hidden_size)),
        "bias_ih": u(ks[2], (4 * hidden_size,)),
        "bias_hh": u(ks[3], (4 * hidden_size,)),
    }


def encoder_lstm_forward(params, x, x_lengths, hidden_key):
    """JAX/Pallas equivalent of encoderLSTM.forward (num_layers == 1).

    Returns (x[:, -1, :], (h_n, c_n)) with h_n/c_n shaped (B, H, num_layers),
    matching the PyTorch module's .permute(1, 2, 0).
    """
    # TODO(synk): num_layers > 1 (stacked LSTM) not implemented; example uses 1.
    B, S, E = x.shape
    H = params["weight_hh"].shape[1]
    Hp = _round_up(H, 128)                  # 128-lane-aligned gate blocks
    tile_b = 8 if B <= 128 else 128         # sublane-aligned batch tiles
    Bp = _round_up(max(B, tile_b), tile_b)
    nb = Bp // tile_b

    # init_hidden_state: torch.rand -> deterministic uniform [0, 1)
    kh, kc = jax.random.split(hidden_key)
    h0 = jax.random.uniform(kh, (B, H), jnp.float32)
    c0 = jax.random.uniform(kc, (B, H), jnp.float32)

    # Pad each gate block (PyTorch order [i|f|g|o]) from H to Hp lanes with
    # zeros: padded gate pre-activations are exactly 0, so padded h/c lanes
    # stay 0 and never perturb the real lanes.
    wih = params["weight_ih"].T             # (E, 4H)
    whh = params["weight_hh"].T             # (H, 4H)
    bias = params["bias_ih"] + params["bias_hh"]
    wih_p = jnp.zeros((E, 4 * Hp), jnp.float32)
    whh_p = jnp.zeros((Hp, 4 * Hp), jnp.float32)
    b_p = jnp.zeros((1, 4 * Hp), jnp.float32)
    for g in range(4):
        wih_p = wih_p.at[:, g * Hp:g * Hp + H].set(wih[:, g * H:(g + 1) * H])
        whh_p = whh_p.at[:H, g * Hp:g * Hp + H].set(whh[:, g * H:(g + 1) * H])
        b_p = b_p.at[0, g * Hp:g * Hp + H].set(bias[g * H:(g + 1) * H])

    # Pad batch to Bp rows / hidden to Hp lanes; lay the sequence out
    # time-major per batch tile: (nb, S*tile_b, E), row index = t*tile_b + b.
    x_pad = jnp.zeros((Bp, S, E), jnp.float32).at[:B].set(x)
    x_tiles = (x_pad.reshape(nb, tile_b, S, E)
               .transpose(0, 2, 1, 3)
               .reshape(nb, S * tile_b, E))
    len_pad = jnp.zeros((Bp, 1), jnp.int32).at[:B, 0].set(
        x_lengths.astype(jnp.int32))
    h0_p = jnp.zeros((Bp, Hp), jnp.float32).at[:B, :H].set(h0)
    c0_p = jnp.zeros((Bp, Hp), jnp.float32).at[:B, :H].set(c0)

    hn_p, cn_p = pl.pallas_call(
        _encoder_lstm_kernel,
        out_shape=(jax.ShapeDtypeStruct((Bp, Hp), jnp.float32),
                   jax.ShapeDtypeStruct((Bp, Hp), jnp.float32)),
        grid=(nb,),
        in_specs=[
            pl.BlockSpec((None, S * tile_b, E), lambda i: (i, 0, 0)),
            pl.BlockSpec((tile_b, 1), lambda i: (i, 0)),
            pl.BlockSpec((tile_b, Hp), lambda i: (i, 0)),
            pl.BlockSpec((tile_b, Hp), lambda i: (i, 0)),
            pl.BlockSpec((E, 4 * Hp), lambda i: (0, 0)),
            pl.BlockSpec((Hp, 4 * Hp), lambda i: (0, 0)),
            pl.BlockSpec((1, 4 * Hp), lambda i: (0, 0)),
        ],
        out_specs=(pl.BlockSpec((tile_b, Hp), lambda i: (i, 0)),
                   pl.BlockSpec((tile_b, Hp), lambda i: (i, 0))),
        scratch_shapes=[pltpu.VMEM((S * tile_b, 4 * Hp), jnp.float32)],
        compiler_params=pltpu.CompilerParams(
            dimension_semantics=("parallel",)),  # batch tiles across TCs (v7x)
    )(x_tiles, len_pad, h0_p, c0_p, wih_p, whh_p, b_p)

    h_n = hn_p[:B, :H]
    c_n = cn_p[:B, :H]

    # pad_packed_sequence pads to max(x_lengths); x[:, -1, :] is therefore the
    # final hidden state for max-length sequences and the 0 padding otherwise.
    t_max = jnp.max(x_lengths)
    out_last = jnp.where((x_lengths == t_max)[:, None], h_n, 0.0)

    # hidden permuted (1, 2, 0): (num_layers, B, H) -> (B, H, num_layers)
    return out_last, (h_n[:, :, None], c_n[:, :, None])


# ----------------------------------------------------------------------------
# Pure-JAX reference (for correctness checking only)
# ----------------------------------------------------------------------------
def _reference_forward(params, x, x_lengths, hidden_key):
    B, S, _ = x.shape
    H = params["weight_hh"].shape[1]
    kh, kc = jax.random.split(hidden_key)
    h = jax.random.uniform(kh, (B, H), jnp.float32)
    c = jax.random.uniform(kc, (B, H), jnp.float32)
    wih = params["weight_ih"].T
    whh = params["weight_hh"].T
    b = params["bias_ih"] + params["bias_hh"]
    hp = lax.Precision.HIGHEST
    for t in range(S):
        gates = (jnp.dot(x[:, t], wih, precision=hp)
                 + jnp.dot(h, whh, precision=hp) + b)
        i_g = jax.nn.sigmoid(gates[:, 0:H])
        f_g = jax.nn.sigmoid(gates[:, H:2 * H])
        g_g = jnp.tanh(gates[:, 2 * H:3 * H])
        o_g = jax.nn.sigmoid(gates[:, 3 * H:4 * H])
        c_new = f_g * c + i_g * g_g
        h_new = o_g * jnp.tanh(c_new)
        m = (t < x_lengths)[:, None]
        h = jnp.where(m, h_new, h)
        c = jnp.where(m, c_new, c)
    t_max = jnp.max(x_lengths)
    out_last = jnp.where((x_lengths == t_max)[:, None], h, 0.0)
    return out_last, (h[:, :, None], c[:, :, None])


# ----------------------------------------------------------------------------
if __name__ == "__main__":
    B, S = 4, 8
    input_size, hidden_size, num_layers = 16, 32, 1

    root = jax.random.PRNGKey(0)
    k_param, k_x, k_hidden = jax.random.split(root, 3)

    params = init_encoder_lstm_params(k_param, input_size, hidden_size)
    x = jax.random.normal(k_x, (B, S, input_size), jnp.float32)
    # pack_padded_sequence expects lengths sorted descending; the masked kernel
    # does not need sorting, but keep the same convention for fidelity.
    x_lengths = jnp.array([8, 6, 3, 1], dtype=jnp.int32)

    fwd = jax.jit(encoder_lstm_forward)
    out_last, (h_n, c_n) = fwd(params, x, x_lengths, k_hidden)
    out_last = jax.block_until_ready(out_last)

    assert out_last.shape == (B, hidden_size), out_last.shape
    assert h_n.shape == (B, hidden_size, num_layers), h_n.shape
    assert c_n.shape == (B, hidden_size, num_layers), c_n.shape
    assert bool(jnp.all(jnp.isfinite(out_last)))
    assert bool(jnp.all(jnp.isfinite(h_n)))
    assert bool(jnp.all(jnp.isfinite(c_n)))

    # Correctness vs. a pure-JAX reference (loose tolerance accounts for MXU
    # multi-pass f32 matmul rounding vs. HIGHEST-precision XLA matmuls).
    ref_out, (ref_h, ref_c) = _reference_forward(params, x, x_lengths, k_hidden)
    assert bool(jnp.allclose(out_last, ref_out, rtol=5e-2, atol=5e-2))
    assert bool(jnp.allclose(h_n, ref_h, rtol=5e-2, atol=5e-2))
    assert bool(jnp.allclose(c_n, ref_c, rtol=5e-2, atol=5e-2))

    print("KERNEL_OK")
</pallas_src>

<mosaic_0001>
module attributes {stable_mosaic.version = 11 : i64} {
  func.func @_encoder_lstm_kernel(%arg0: i32, %arg1: memref<1x64x16xf32, #tpu.memory_space<vmem>>, %arg2: memref<8x1xi32, #tpu.memory_space<vmem>>, %arg3: memref<8x128xf32, #tpu.memory_space<vmem>>, %arg4: memref<8x128xf32, #tpu.memory_space<vmem>>, %arg5: memref<16x512xf32, #tpu.memory_space<vmem>>, %arg6: memref<128x512xf32, #tpu.memory_space<vmem>>, %arg7: memref<1x512xf32, #tpu.memory_space<vmem>>, %arg8: memref<8x128xf32, #tpu.memory_space<vmem>>, %arg9: memref<8x128xf32, #tpu.memory_space<vmem>>, %arg10: memref<64x512xf32, #tpu.memory_space<vmem>>) attributes {dimension_semantics = [#tpu.dimension_semantics<parallel>], iteration_bounds = array<i64: 1>, scalar_prefetch = 0 : i64, scratch_operands = 1 : i64, tpu.core_type = #tpu.core_type<tc>, window_params = [{transform_indices = @transform_0, window_bounds = array<i64: 1, 64, 16>}, {transform_indices = @transform_1, window_bounds = array<i64: 8, 1>}, {transform_indices = @transform_2, window_bounds = array<i64: 8, 128>}, {transform_indices = @transform_3, window_bounds = array<i64: 8, 128>}, {pipeline_mode = #tpu.pipeline_mode<synchronous>, transform_indices = @transform_4, window_bounds = array<i64: 16, 512>}, {pipeline_mode = #tpu.pipeline_mode<synchronous>, transform_indices = @transform_5, window_bounds = array<i64: 128, 512>}, {pipeline_mode = #tpu.pipeline_mode<synchronous>, transform_indices = @transform_6, window_bounds = array<i64: 1, 512>}, {transform_indices = @transform_7, window_bounds = array<i64: 8, 128>}, {transform_indices = @transform_8, window_bounds = array<i64: 8, 128>}]} {
    %c0 = arith.constant 0 : index
    %c0_0 = arith.constant 0 : index
    %c0_1 = arith.constant 0 : index
    %0 = vector.load %arg1[%c0, %c0_0, %c0_1] : memref<1x64x16xf32, #tpu.memory_space<vmem>>, vector<1x64x16xf32>
    %1 = vector.shape_cast %0 : vector<1x64x16xf32> to vector<64x16xf32>
    %c0_2 = arith.constant 0 : index
    %c0_3 = arith.constant 0 : index
    %2 = vector.load %arg5[%c0_2, %c0_3] : memref<16x512xf32, #tpu.memory_space<vmem>>, vector<16x512xf32>
    %cst = arith.constant dense<0.000000e+00> : vector<64x512xf32>
    %3 = tpu.matmul %1, %2, %cst {dimension_numbers = #tpu.dot_dimension_numbers<[1], [0], [0], [1], [0, 0, 1, 1], [], []>} : vector<64x16xf32>, vector<16x512xf32>, vector<64x512xf32> -> vector<64x512xf32>
    %c0_4 = arith.constant 0 : index
    %c0_5 = arith.constant 0 : index
    %4 = vector.load %arg7[%c0_4, %c0_5] : memref<1x512xf32, #tpu.memory_space<vmem>>, vector<1x512xf32>
    %5 = vector.broadcast %4 : vector<1x512xf32> to vector<64x512xf32>
    %6 = arith.addf %3, %5 : vector<64x512xf32>
    %c0_6 = arith.constant 0 : index
    %c0_7 = arith.constant 0 : index
    %7 = vector.load %arg10[%c0_6, %c0_7] : memref<64x512xf32, #tpu.memory_space<vmem>>, vector<64x512xf32>
    tpu.vector_store %arg10[%c0_6, %c0_7], %6 {strides = array<i32>} : memref<64x512xf32, #tpu.memory_space<vmem>>, vector<64x512xf32>,
    %c0_8 = arith.constant 0 : index
    %c0_9 = arith.constant 0 : index
    %8 = vector.load %arg2[%c0_8, %c0_9] : memref<8x1xi32, #tpu.memory_space<vmem>>, vector<8x1xi32>
    %c0_10 = arith.constant 0 : index
    %c0_11 = arith.constant 0 : index
    %9 = vector.load %arg6[%c0_10, %c0_11] : memref<128x512xf32, #tpu.memory_space<vmem>>, vector<128x512xf32>
    %c0_12 = arith.constant 0 : index
    %c0_13 = arith.constant 0 : index
    %10 = vector.load %arg3[%c0_12, %c0_13] : memref<8x128xf32, #tpu.memory_space<vmem>>, vector<8x128xf32>
    %c0_14 = arith.constant 0 : index
    %c0_15 = arith.constant 0 : index
    %11 = vector.load %arg4[%c0_14, %c0_15] : memref<8x128xf32, #tpu.memory_space<vmem>>, vector<8x128xf32>
    %c0_i32 = arith.constant 0 : i32
    %c8_i32 = arith.constant 8 : i32
    %12 = arith.muli %c0_i32, %c8_i32 : i32
    %13 = tpu.assume_multiple %12, 8 : i32
    %14 = arith.index_cast %13 : i32 to index
    %c0_16 = arith.constant 0 : index
    %15 = vector.load %arg10[%14, %c0_16] : memref<64x512xf32, #tpu.memory_space<vmem>>, vector<8x512xf32>
    %cst_17 = arith.constant dense<0.000000e+00> : vector<8x512xf32>
    %16 = tpu.matmul %10, %9, %cst_17 {dimension_numbers = #tpu.dot_dimension_numbers<[1], [0], [0], [1], [0, 0, 1, 1], [], []>} : vector<8x128xf32>, vector<128x512xf32>, vector<8x512xf32> -> vector<8x512xf32>
    %17 = arith.addf %15, %16 : vector<8x512xf32>
    %18 = vector.extract_strided_slice %17 {offsets = [0, 0], sizes = [8, 128], strides = [1, 1]} : vector<8x512xf32> to vector<8x128xf32>
    %19 = arith.negf %18 : vector<8x128xf32>
    %20 = math.exp %19 : vector<8x128xf32>
    %cst_18 = arith.constant 1.000000e+00 : f32
    %21 = vector.broadcast %cst_18 : f32 to vector<8x128xf32>
    %22 = arith.addf %21, %20 : vector<8x128xf32>
    %23 = arith.divf %21, %22 : vector<8x128xf32>
    %24 = vector.extract_strided_slice %17 {offsets = [0, 128], sizes = [8, 128], strides = [1, 1]} : vector<8x512xf32> to vector<8x128xf32>
    %25 = arith.negf %24 : vector<8x128xf32>
    %26 = math.exp %25 : vector<8x128xf32>
    %cst_19 = arith.constant 1.000000e+00 : f32
    %27 = vector.broadcast %cst_19 : f32 to vector<8x128xf32>
    %28 = arith.addf %27, %26 : vector<8x128xf32>
    %29 = arith.divf %27, %28 : vector<8x128xf32>
    %30 = vector.extract_strided_slice %17 {offsets = [0, 256], sizes = [8, 128], strides = [1, 1]} : vector<8x512xf32> to vector<8x128xf32>
    %31 = math.tanh %30 : vector<8x128xf32>
    %32 = vector.extract_strided_slice %17 {offsets = [0, 384], sizes = [8, 128], strides = [1, 1]} : vector<8x512xf32> to vector<8x128xf32>
    %33 = arith.negf %32 : vector<8x128xf32>
    %34 = math.exp %33 : vector<8x128xf32>
    %cst_20 = arith.constant 1.000000e+00 : f32
    %35 = vector.broadcast %cst_20 : f32 to vector<8x128xf32>
    %36 = arith.addf %35, %34 : vector<8x128xf32>
    %37 = arith.divf %35, %36 : vector<8x128xf32>
    %38 = arith.mulf %29, %11 : vector<8x128xf32>
    %39 = arith.mulf %23, %31 : vector<8x128xf32>
    %40 = arith.addf %38, %39 : vector<8x128xf32>
    %41 = math.tanh %40 : vector<8x128xf32>
    %42 = arith.mulf %37, %41 : vector<8x128xf32>
    %43 = vector.broadcast %c0_i32 : i32 to vector<8x1xi32>
    %44 = arith.cmpi slt, %43, %8 : vector<8x1xi32>
    %45 = vector.shape_cast %44 : vector<8x1xi1> to vector<8x1xi1>
    %46 = vector.broadcast %45 : vector<8x1xi1> to vector<8x128xi1>
    %47 = arith.select %46, %42, %10 : vector<8x128xi1>, vector<8x128xf32>
    %48 = vector.shape_cast %44 : vector<8x1xi1> to vector<8x1xi1>
    %49 = vector.broadcast %48 : vector<8x1xi1> to vector<8x128xi1>
    %50 = arith.select %49, %40, %11 : vector<8x128xi1>, vector<8x128xf32>
    %c1_i32 = arith.constant 1 : i32
    %c8_i32_21 = arith.constant 8 : i32
    %51 = arith.muli %c1_i32, %c8_i32_21 : i32
    %52 = tpu.assume_multiple %51, 8 : i32
    %53 = arith.index_cast %52 : i32 to index
    %c0_22 = arith.constant 0 : index
    %54 = vector.load %arg10[%53, %c0_22] : memref<64x512xf32, #tpu.memory_space<vmem>>, vector<8x512xf32>
    %cst_23 = arith.constant dense<0.000000e+00> : vector<8x512xf32>
    %55 = tpu.matmul %47, %9, %cst_23 {dimension_numbers = #tpu.dot_dimension_numbers<[1], [0], [0], [1], [0, 0, 1, 1], [], []>} : vector<8x128xf32>, vector<128x512xf32>, vector<8x512xf32> -> vector<8x512xf32>
    %56 = arith.addf %54, %55 : vector<8x512xf32>
    %57 = vector.extract_strided_slice %56 {offsets = [0, 0], sizes = [8, 128], strides = [1, 1]} : vector<8x512xf32> to vector<8x128xf32>
    %58 = arith.negf %57 : vector<8x128xf32>
    %59 = math.exp %58 : vector<8x128xf32>
    %cst_24 = arith.constant 1.000000e+00 : f32
    %60 = vector.broadcast %cst_24 : f32 to vector<8x128xf32>
    %61 = arith.addf %60, %59 : vector<8x128xf32>
    %62 = arith.divf %60, %61 : vector<8x128xf32>
    %63 = vector.extract_strided_slice %56 {offsets = [0, 128], sizes = [8, 128], strides = [1, 1]} : vector<8x512xf32> to vector<8x128xf32>
    %64 = arith.negf %63 : vector<8x128xf32>
    %65 = math.exp %64 : vector<8x128xf32>
    %cst_25 = arith.constant 1.000000e+00 : f32
    %66 = vector.broadcast %cst_25 : f32 to vector<8x128xf32>
    %67 = arith.addf %66, %65 : vector<8x128xf32>
    %68 = arith.divf %66, %67 : vector<8x128xf32>
    %69 = vector.extract_strided_slice %56 {offsets = [0, 256], sizes = [8, 128], strides = [1, 1]} : vector<8x512xf32> to vector<8x128xf32>
    %70 = math.tanh %69 : vector<8x128xf32>
    %71 = vector.extract_strided_slice %56 {offsets = [0, 384], sizes = [8, 128], strides = [1, 1]} : vector<8x512xf32> to vector<8x128xf32>
    %72 = arith.negf %71 : vector<8x128xf32>
    %73 = math.exp %72 : vector<8x128xf32>
    %cst_26 = arith.constant 1.000000e+00 : f32
    %74 = vector.broadcast %cst_26 : f32 to vector<8x128xf32>
    %75 = arith.addf %74, %73 : vector<8x128xf32>
    %76 = arith.divf %74, %75 : vector<8x128xf32>
    %77 = arith.mulf %68, %50 : vector<8x128xf32>
    %78 = arith.mulf %62, %70 : vector<8x128xf32>
    %79 = arith.addf %77, %78 : vector<8x128xf32>
    %80 = math.tanh %79 : vector<8x128xf32>
    %81 = arith.mulf %76, %80 : vector<8x128xf32>
    %82 = vector.broadcast %c1_i32 : i32 to vector<8x1xi32>
    %83 = arith.cmpi slt, %82, %8 : vector<8x1xi32>
    %84 = vector.shape_cast %83 : vector<8x1xi1> to vector<8x1xi1>
    %85 = vector.broadcast %84 : vector<8x1xi1> to vector<8x128xi1>
    %86 = arith.select %85, %81, %47 : vector<8x128xi1>, vector<8x128xf32>
    %87 = vector.shape_cast %83 : vector<8x1xi1> to vector<8x1xi1>
    %88 = vector.broadcast %87 : vector<8x1xi1> to vector<8x128xi1>
    %89 = arith.select %88, %79, %50 : vector<8x128xi1>, vector<8x128xf32>
    %c2_i32 = arith.constant 2 : i32
    %c8_i32_27 = arith.constant 8 : i32
    %90 = arith.muli %c2_i32, %c8_i32_27 : i32
    %91 = tpu.assume_multiple %90, 8 : i32
    %92 = arith.index_cast %91 : i32 to index
    %c0_28 = arith.constant 0 : index
    %93 = vector.load %arg10[%92, %c0_28] : memref<64x512xf32, #tpu.memory_space<vmem>>, vector<8x512xf32>
    %cst_29 = arith.constant dense<0.000000e+00> : vector<8x512xf32>
    %94 = tpu.matmul %86, %9, %cst_29 {dimension_numbers = #tpu.dot_dimension_numbers<[1], [0], [0], [1], [0, 0, 1, 1], [], []>} : vector<8x128xf32>, vector<128x512xf32>, vector<8x512xf32> -> vector<8x512xf32>
    %95 = arith.addf %93, %94 : vector<8x512xf32>
    %96 = vector.extract_strided_slice %95 {offsets = [0, 0], sizes = [8, 128], strides = [1, 1]} : vector<8x512xf32> to vector<8x128xf32>
    %97 = arith.negf %96 : vector<8x128xf32>
    %98 = math.exp %97 : vector<8x128xf32>
    %cst_30 = arith.constant 1.000000e+00 : f32
    %99 = vector.broadcast %cst_30 : f32 to vector<8x128xf32>
    %100 = arith.addf %99, %98 : vector<8x128xf32>
    %101 = arith.divf %99, %100 : vector<8x128xf32>
    %102 = vector.extract_strided_slice %95 {offsets = [0, 128], sizes = [8, 128], strides = [1, 1]} : vector<8x512xf32> to vector<8x128xf32>
    %103 = arith.negf %102 : vector<8x128xf32>
    %104 = math.exp %103 : vector<8x128xf32>
    %cst_31 = arith.constant 1.000000e+00 : f32
    %105 = vector.broadcast %cst_31 : f32 to vector<8x128xf32>
    %106 = arith.addf %105, %104 : vector<8x128xf32>
    %107 = arith.divf %105, %106 : vector<8x128xf32>
    %108 = vector.extract_strided_slice %95 {offsets = [0, 256], sizes = [8, 128], strides = [1, 1]} : vector<8x512xf32> to vector<8x128xf32>
    %109 = math.tanh %108 : vector<8x128xf32>
    %110 = vector.extract_strided_slice %95 {offsets = [0, 384], sizes = [8, 128], strides = [1, 1]} : vector<8x512xf32> to vector<8x128xf32>
    %111 = arith.negf %110 : vector<8x128xf32>
    %112 = math.exp %111 : vector<8x128xf32>
    %cst_32 = arith.constant 1.000000e+00 : f32
    %113 = vector.broadcast %cst_32 : f32 to vector<8x128xf32>
    %114 = arith.addf %113, %112 : vector<8x128xf32>
    %115 = arith.divf %113, %114 : vector<8x128xf32>
    %116 = arith.mulf %107, %89 : vector<8x128xf32>
    %117 = arith.mulf %101, %109 : vector<8x128xf32>
    %118 = arith.addf %116, %117 : vector<8x128xf32>
    %119 = math.tanh %118 : vector<8x128xf32>
    %120 = arith.mulf %115, %119 : vector<8x128xf32>
    %121 = vector.broadcast %c2_i32 : i32 to vector<8x1xi32>
    %122 = arith.cmpi slt, %121, %8 : vector<8x1xi32>
    %123 = vector.shape_cast %122 : vector<8x1xi1> to vector<8x1xi1>
    %124 = vector.broadcast %123 : vector<8x1xi1> to vector<8x128xi1>
    %125 = arith.select %124, %120, %86 : vector<8x128xi1>, vector<8x128xf32>
    %126 = vector.shape_cast %122 : vector<8x1xi1> to vector<8x1xi1>
    %127 = vector.broadcast %126 : vector<8x1xi1> to vector<8x128xi1>
    %128 = arith.select %127, %118, %89 : vector<8x128xi1>, vector<8x128xf32>
    %c3_i32 = arith.constant 3 : i32
    %c8_i32_33 = arith.constant 8 : i32
    %129 = arith.muli %c3_i32, %c8_i32_33 : i32
    %130 = tpu.assume_multiple %129, 8 : i32
    %131 = arith.index_cast %130 : i32 to index
    %c0_34 = arith.constant 0 : index
    %132 = vector.load %arg10[%131, %c0_34] : memref<64x512xf32, #tpu.memory_space<vmem>>, vector<8x512xf32>
    %cst_35 = arith.constant dense<0.000000e+00> : vector<8x512xf32>
    %133 = tpu.matmul %125, %9, %cst_35 {dimension_numbers = #tpu.dot_dimension_numbers<[1], [0], [0], [1], [0, 0, 1, 1], [], []>} : vector<8x128xf32>, vector<128x512xf32>, vector<8x512xf32> -> vector<8x512xf32>
    %134 = arith.addf %132, %133 : vector<8x512xf32>
    %135 = vector.extract_strided_slice %134 {offsets = [0, 0], sizes = [8, 128], strides = [1, 1]} : vector<8x512xf32> to vector<8x128xf32>
    %136 = arith.negf %135 : vector<8x128xf32>
    %137 = math.exp %136 : vector<8x128xf32>
    %cst_36 = arith.constant 1.000000e+00 : f32
    %138 = vector.broadcast %cst_36 : f32 to vector<8x128xf32>
    %139 = arith.addf %138, %137 : vector<8x128xf32>
    %140 = arith.divf %138, %139 : vector<8x128xf32>
    %141 = vector.extract_strided_slice %134 {offsets = [0, 128], sizes = [8, 128], strides = [1, 1]} : vector<8x512xf32> to vector<8x128xf32>
    %142 = arith.negf %141 : vector<8x128xf32>
    %143 = math.exp %142 : vector<8x128xf32>
    %cst_37 = arith.constant 1.000000e+00 : f32
    %144 = vector.broadcast %cst_37 : f32 to vector<8x128xf32>
    %145 = arith.addf %144, %143 : vector<8x128xf32>
    %146 = arith.divf %144, %145 : vector<8x128xf32>
    %147 = vector.extract_strided_slice %134 {offsets = [0, 256], sizes = [8, 128], strides = [1, 1]} : vector<8x512xf32> to vector<8x128xf32>
    %148 = math.tanh %147 : vector<8x128xf32>
    %149 = vector.extract_strided_slice %134 {offsets = [0, 384], sizes = [8, 128], strides = [1, 1]} : vector<8x512xf32> to vector<8x128xf32>
    %150 = arith.negf %149 : vector<8x128xf32>
    %151 = math.exp %150 : vector<8x128xf32>
    %cst_38 = arith.constant 1.000000e+00 : f32
    %152 = vector.broadcast %cst_38 : f32 to vector<8x128xf32>
    %153 = arith.addf %152, %151 : vector<8x128xf32>
    %154 = arith.divf %152, %153 : vector<8x128xf32>
    %155 = arith.mulf %146, %128 : vector<8x128xf32>
    %156 = arith.mulf %140, %148 : vector<8x128xf32>
    %157 = arith.addf %155, %156 : vector<8x128xf32>
    %158 = math.tanh %157 : vector<8x128xf32>
    %159 = arith.mulf %154, %158 : vector<8x128xf32>
    %160 = vector.broadcast %c3_i32 : i32 to vector<8x1xi32>
    %161 = arith.cmpi slt, %160, %8 : vector<8x1xi32>
    %162 = vector.shape_cast %161 : vector<8x1xi1> to vector<8x1xi1>
    %163 = vector.broadcast %162 : vector<8x1xi1> to vector<8x128xi1>
    %164 = arith.select %163, %159, %125 : vector<8x128xi1>, vector<8x128xf32>
    %165 = vector.shape_cast %161 : vector<8x1xi1> to vector<8x1xi1>
    %166 = vector.broadcast %165 : vector<8x1xi1> to vector<8x128xi1>
    %167 = arith.select %166, %157, %128 : vector<8x128xi1>, vector<8x128xf32>
    %c4_i32 = arith.constant 4 : i32
    %c8_i32_39 = arith.constant 8 : i32
    %168 = arith.muli %c4_i32, %c8_i32_39 : i32
    %169 = tpu.assume_multiple %168, 8 : i32
    %170 = arith.index_cast %169 : i32 to index
    %c0_40 = arith.constant 0 : index
    %171 = vector.load %arg10[%170, %c0_40] : memref<64x512xf32, #tpu.memory_space<vmem>>, vector<8x512xf32>
    %cst_41 = arith.constant dense<0.000000e+00> : vector<8x512xf32>
    %172 = tpu.matmul %164, %9, %cst_41 {dimension_numbers = #tpu.dot_dimension_numbers<[1], [0], [0], [1], [0, 0, 1, 1], [], []>} : vector<8x128xf32>, vector<128x512xf32>, vector<8x512xf32> -> vector<8x512xf32>
    %173 = arith.addf %171, %172 : vector<8x512xf32>
    %174 = vector.extract_strided_slice %173 {offsets = [0, 0], sizes = [8, 128], strides = [1, 1]} : vector<8x512xf32> to vector<8x128xf32>
    %175 = arith.negf %174 : vector<8x128xf32>
    %176 = math.exp %175 : vector<8x128xf32>
    %cst_42 = arith.constant 1.000000e+00 : f32
    %177 = vector.broadcast %cst_42 : f32 to vector<8x128xf32>
    %178 = arith.addf %177, %176 : vector<8x128xf32>
    %179 = arith.divf %177, %178 : vector<8x128xf32>
    %180 = vector.extract_strided_slice %173 {offsets = [0, 128], sizes = [8, 128], strides = [1, 1]} : vector<8x512xf32> to vector<8x128xf32>
    %181 = arith.negf %180 : vector<8x128xf32>
    %182 = math.exp %181 : vector<8x128xf32>
    %cst_43 = arith.constant 1.000000e+00 : f32
    %183 = vector.broadcast %cst_43 : f32 to vector<8x128xf32>
    %184 = arith.addf %183, %182 : vector<8x128xf32>
    %185 = arith.divf %183, %184 : vector<8x128xf32>
    %186 = vector.extract_strided_slice %173 {offsets = [0, 256], sizes = [8, 128], strides = [1, 1]} : vector<8x512xf32> to vector<8x128xf32>
    %187 = math.tanh %186 : vector<8x128xf32>
    %188 = vector.extract_strided_slice %173 {offsets = [0, 384], sizes = [8, 128], strides = [1, 1]} : vector<8x512xf32> to vector<8x128xf32>
    %189 = arith.negf %188 : vector<8x128xf32>
    %190 = math.exp %189 : vector<8x128xf32>
    %cst_44 = arith.constant 1.000000e+00 : f32
    %191 = vector.broadcast %cst_44 : f32 to vector<8x128xf32>
    %192 = arith.addf %191, %190 : vector<8x128xf32>
    %193 = arith.divf %191, %192 : vector<8x128xf32>
    %194 = arith.mulf %185, %167 : vector<8x128xf32>
    %195 = arith.mulf %179, %187 : vector<8x128xf32>
    %196 = arith.addf %194, %195 : vector<8x128xf32>
    %197 = math.tanh %196 : vector<8x128xf32>
    %198 = arith.mulf %193, %197 : vector<8x128xf32>
    %199 = vector.broadcast %c4_i32 : i32 to vector<8x1xi32>
    %200 = arith.cmpi slt, %199, %8 : vector<8x1xi32>
    %201 = vector.shape_cast %200 : vector<8x1xi1> to vector<8x1xi1>
    %202 = vector.broadcast %201 : vector<8x1xi1> to vector<8x128xi1>
    %203 = arith.select %202, %198, %164 : vector<8x128xi1>, vector<8x128xf32>
    %204 = vector.shape_cast %200 : vector<8x1xi1> to vector<8x1xi1>
    %205 = vector.broadcast %204 : vector<8x1xi1> to vector<8x128xi1>
    %206 = arith.select %205, %196, %167 : vector<8x128xi1>, vector<8x128xf32>
    %c5_i32 = arith.constant 5 : i32
    %c8_i32_45 = arith.constant 8 : i32
    %207 = arith.muli %c5_i32, %c8_i32_45 : i32
    %208 = tpu.assume_multiple %207, 8 : i32
    %209 = arith.index_cast %208 : i32 to index
    %c0_46 = arith.constant 0 : index
    %210 = vector.load %arg10[%209, %c0_46] : memref<64x512xf32, #tpu.memory_space<vmem>>, vector<8x512xf32>
    %cst_47 = arith.constant dense<0.000000e+00> : vector<8x512xf32>
    %211 = tpu.matmul %203, %9, %cst_47 {dimension_numbers = #tpu.dot_dimension_numbers<[1], [0], [0], [1], [0, 0, 1, 1], [], []>} : vector<8x128xf32>, vector<128x512xf32>, vector<8x512xf32> -> vector<8x512xf32>
    %212 = arith.addf %210, %211 : vector<8x512xf32>
    %213 = vector.extract_strided_slice %212 {offsets = [0, 0], sizes = [8, 128], strides = [1, 1]} : vector<8x512xf32> to vector<8x128xf32>
    %214 = arith.negf %213 : vector<8x128xf32>
    %215 = math.exp %214 : vector<8x128xf32>
    %cst_48 = arith.constant 1.000000e+00 : f32
    %216 = vector.broadcast %cst_48 : f32 to vector<8x128xf32>
    %217 = arith.addf %216, %215 : vector<8x128xf32>
    %218 = arith.divf %216, %217 : vector<8x128xf32>
    %219 = vector.extract_strided_slice %212 {offsets = [0, 128], sizes = [8, 128], strides = [1, 1]} : vector<8x512xf32> to vector<8x128xf32>
    %220 = arith.negf %219 : vector<8x128xf32>
    %221 = math.exp %220 : vector<8x128xf32>
    %cst_49 = arith.constant 1.000000e+00 : f32
    %222 = vector.broadcast %cst_49 : f32 to vector<8x128xf32>
    %223 = arith.addf %222, %221 : vector<8x128xf32>
    %224 = arith.divf %222, %223 : vector<8x128xf32>
    %225 = vector.extract_strided_slice %212 {offsets = [0, 256], sizes = [8, 128], strides = [1, 1]} : vector<8x512xf32> to vector<8x128xf32>
    %226 = math.tanh %225 : vector<8x128xf32>
    %227 = vector.extract_strided_slice %212 {offsets = [0, 384], sizes = [8, 128], strides = [1, 1]} : vector<8x512xf32> to vector<8x128xf32>
    %228 = arith.negf %227 : vector<8x128xf32>
    %229 = math.exp %228 : vector<8x128xf32>
    %cst_50 = arith.constant 1.000000e+00 : f32
    %230 = vector.broadcast %cst_50 : f32 to vector<8x128xf32>
    %231 = arith.addf %230, %229 : vector<8x128xf32>
    %232 = arith.divf %230, %231 : vector<8x128xf32>
    %233 = arith.mulf %224, %206 : vector<8x128xf32>
    %234 = arith.mulf %218, %226 : vector<8x128xf32>
    %235 = arith.addf %233, %234 : vector<8x128xf32>
    %236 = math.tanh %235 : vector<8x128xf32>
    %237 = arith.mulf %232, %236 : vector<8x128xf32>
    %238 = vector.broadcast %c5_i32 : i32 to vector<8x1xi32>
    %239 = arith.cmpi slt, %238, %8 : vector<8x1xi32>
    %240 = vector.shape_cast %239 : vector<8x1xi1> to vector<8x1xi1>
    %241 = vector.broadcast %240 : vector<8x1xi1> to vector<8x128xi1>
    %242 = arith.select %241, %237, %203 : vector<8x128xi1>, vector<8x128xf32>
    %243 = vector.shape_cast %239 : vector<8x1xi1> to vector<8x1xi1>
    %244 = vector.broadcast %243 : vector<8x1xi1> to vector<8x128xi1>
    %245 = arith.select %244, %235, %206 : vector<8x128xi1>, vector<8x128xf32>
    %c6_i32 = arith.constant 6 : i32
    %c8_i32_51 = arith.constant 8 : i32
    %246 = arith.muli %c6_i32, %c8_i32_51 : i32
    %247 = tpu.assume_multiple %246, 8 : i32
    %248 = arith.index_cast %247 : i32 to index
    %c0_52 = arith.constant 0 : index
    %249 = vector.load %arg10[%248, %c0_52] : memref<64x512xf32, #tpu.memory_space<vmem>>, vector<8x512xf32>
    %cst_53 = arith.constant dense<0.000000e+00> : vector<8x512xf32>
    %250 = tpu.matmul %242, %9, %cst_53 {dimension_numbers = #tpu.dot_dimension_numbers<[1], [0], [0], [1], [0, 0, 1, 1], [], []>} : vector<8x128xf32>, vector<128x512xf32>, vector<8x512xf32> -> vector<8x512xf32>
    %251 = arith.addf %249, %250 : vector<8x512xf32>
    %252 = vector.extract_strided_slice %251 {offsets = [0, 0], sizes = [8, 128], strides = [1, 1]} : vector<8x512xf32> to vector<8x128xf32>
    %253 = arith.negf %252 : vector<8x128xf32>
    %254 = math.exp %253 : vector<8x128xf32>
    %cst_54 = arith.constant 1.000000e+00 : f32
    %255 = vector.broadcast %cst_54 : f32 to vector<8x128xf32>
    %256 = arith.addf %255, %254 : vector<8x128xf32>
    %257 = arith.divf %255, %256 : vector<8x128xf32>
    %258 = vector.extract_strided_slice %251 {offsets = [0, 128], sizes = [8, 128], strides = [1, 1]} : vector<8x512xf32> to vector<8x128xf32>
    %259 = arith.negf %258 : vector<8x128xf32>
    %260 = math.exp %259 : vector<8x128xf32>
    %cst_55 = arith.constant 1.000000e+00 : f32
    %261 = vector.broadcast %cst_55 : f32 to vector<8x128xf32>
    %262 = arith.addf %261, %260 : vector<8x128xf32>
    %263 = arith.divf %261, %262 : vector<8x128xf32>
    %264 = vector.extract_strided_slice %251 {offsets = [0, 256], sizes = [8, 128], strides = [1, 1]} : vector<8x512xf32> to vector<8x128xf32>
    %265 = math.tanh %264 : vector<8x128xf32>
    %266 = vector.extract_strided_slice %251 {offsets = [0, 384], sizes = [8, 128], strides = [1, 1]} : vector<8x512xf32> to vector<8x128xf32>
    %267 = arith.negf %266 : vector<8x128xf32>
    %268 = math.exp %267 : vector<8x128xf32>
    %cst_56 = arith.constant 1.000000e+00 : f32
    %269 = vector.broadcast %cst_56 : f32 to vector<8x128xf32>
    %270 = arith.addf %269, %268 : vector<8x128xf32>
    %271 = arith.divf %269, %270 : vector<8x128xf32>
    %272 = arith.mulf %263, %245 : vector<8x128xf32>
    %273 = arith.mulf %257, %265 : vector<8x128xf32>
    %274 = arith.addf %272, %273 : vector<8x128xf32>
    %275 = math.tanh %274 : vector<8x128xf32>
    %276 = arith.mulf %271, %275 : vector<8x128xf32>
    %277 = vector.broadcast %c6_i32 : i32 to vector<8x1xi32>
    %278 = arith.cmpi slt, %277, %8 : vector<8x1xi32>
    %279 = vector.shape_cast %278 : vector<8x1xi1> to vector<8x1xi1>
    %280 = vector.broadcast %279 : vector<8x1xi1> to vector<8x128xi1>
    %281 = arith.select %280, %276, %242 : vector<8x128xi1>, vector<8x128xf32>
    %282 = vector.shape_cast %278 : vector<8x1xi1> to vector<8x1xi1>
    %283 = vector.broadcast %282 : vector<8x1xi1> to vector<8x128xi1>
    %284 = arith.select %283, %274, %245 : vector<8x128xi1>, vector<8x128xf32>
    %c7_i32 = arith.constant 7 : i32
    %c8_i32_57 = arith.constant 8 : i32
    %285 = arith.muli %c7_i32, %c8_i32_57 : i32
    %286 = tpu.assume_multiple %285, 8 : i32
    %287 = arith.index_cast %286 : i32 to index
    %c0_58 = arith.constant 0 : index
    %288 = vector.load %arg10[%287, %c0_58] : memref<64x512xf32, #tpu.memory_space<vmem>>, vector<8x512xf32>
    %cst_59 = arith.constant dense<0.000000e+00> : vector<8x512xf32>
    %289 = tpu.matmul %281, %9, %cst_59 {dimension_numbers = #tpu.dot_dimension_numbers<[1], [0], [0], [1], [0, 0, 1, 1], [], []>} : vector<8x128xf32>, vector<128x512xf32>, vector<8x512xf32> -> vector<8x512xf32>
    %290 = arith.addf %288, %289 : vector<8x512xf32>
    %291 = vector.extract_strided_slice %290 {offsets = [0, 0], sizes = [8, 128], strides = [1, 1]} : vector<8x512xf32> to vector<8x128xf32>
    %292 = arith.negf %291 : vector<8x128xf32>
    %293 = math.exp %292 : vector<8x128xf32>
    %cst_60 = arith.constant 1.000000e+00 : f32
    %294 = vector.broadcast %cst_60 : f32 to vector<8x128xf32>
    %295 = arith.addf %294, %293 : vector<8x128xf32>
    %296 = arith.divf %294, %295 : vector<8x128xf32>
    %297 = vector.extract_strided_slice %290 {offsets = [0, 128], sizes = [8, 128], strides = [1, 1]} : vector<8x512xf32> to vector<8x128xf32>
    %298 = arith.negf %297 : vector<8x128xf32>
    %299 = math.exp %298 : vector<8x128xf32>
    %cst_61 = arith.constant 1.000000e+00 : f32
    %300 = vector.broadcast %cst_61 : f32 to vector<8x128xf32>
    %301 = arith.addf %300, %299 : vector<8x128xf32>
    %302 = arith.divf %300, %301 : vector<8x128xf32>
    %303 = vector.extract_strided_slice %290 {offsets = [0, 256], sizes = [8, 128], strides = [1, 1]} : vector<8x512xf32> to vector<8x128xf32>
    %304 = math.tanh %303 : vector<8x128xf32>
    %305 = vector.extract_strided_slice %290 {offsets = [0, 384], sizes = [8, 128], strides = [1, 1]} : vector<8x512xf32> to vector<8x128xf32>
    %306 = arith.negf %305 : vector<8x128xf32>
    %307 = math.exp %306 : vector<8x128xf32>
    %cst_62 = arith.constant 1.000000e+00 : f32
    %308 = vector.broadcast %cst_62 : f32 to vector<8x128xf32>
    %309 = arith.addf %308, %307 : vector<8x128xf32>
    %310 = arith.divf %308, %309 : vector<8x128xf32>
    %311 = arith.mulf %302, %284 : vector<8x128xf32>
    %312 = arith.mulf %296, %304 : vector<8x128xf32>
    %313 = arith.addf %311, %312 : vector<8x128xf32>
    %314 = math.tanh %313 : vector<8x128xf32>
    %315 = arith.mulf %310, %314 : vector<8x128xf32>
    %316 = vector.broadcast %c7_i32 : i32 to vector<8x1xi32>
    %317 = arith.cmpi slt, %316, %8 : vector<8x1xi32>
    %318 = vector.shape_cast %317 : vector<8x1xi1> to vector<8x1xi1>
    %319 = vector.broadcast %318 : vector<8x1xi1> to vector<8x128xi1>
    %320 = arith.select %319, %315, %281 : vector<8x128xi1>, vector<8x128xf32>
    %321 = vector.shape_cast %317 : vector<8x1xi1> to vector<8x1xi1>
    %322 = vector.broadcast %321 : vector<8x1xi1> to vector<8x128xi1>
    %323 = arith.select %322, %313, %284 : vector<8x128xi1>, vector<8x128xf32>
    %c8_i32_63 = arith.constant 8 : i32
    %c0_64 = arith.constant 0 : index
    %c0_65 = arith.constant 0 : index
    %324 = vector.load %arg8[%c0_64, %c0_65] : memref<8x128xf32, #tpu.memory_space<vmem>>, vector<8x128xf32>
    tpu.vector_store %arg8[%c0_64, %c0_65], %320 {strides = array<i32>} : memref<8x128xf32, #tpu.memory_space<vmem>>, vector<8x128xf32>,
    %c0_66 = arith.constant 0 : index
    %c0_67 = arith.constant 0 : index
    %325 = vector.load %arg9[%c0_66, %c0_67] : memref<8x128xf32, #tpu.memory_space<vmem>>, vector<8x128xf32>
    tpu.vector_store %arg9[%c0_66, %c0_67], %323 {strides = array<i32>} : memref<8x128xf32, #tpu.memory_space<vmem>>, vector<8x128xf32>,
    return
  }
  func.func @transform_0(%arg0: i32) -> (i32, i32, i32) {
    %c0_i32 = arith.constant 0 : i32
    %c0_i32_0 = arith.constant 0 : i32
    %c0_i32_1 = arith.constant 0 : i32
    return %arg0, %c0_i32, %c0_i32_0 : i32, i32, i32
  }
  func.func @transform_1(%arg0: i32) -> (i32, i32) {
    %c0_i32 = arith.constant 0 : i32
    %c0_i32_0 = arith.constant 0 : i32
    return %arg0, %c0_i32 : i32, i32
  }
  func.func @transform_2(%arg0: i32) -> (i32, i32) {
    %c0_i32 = arith.constant 0 : i32
    %c0_i32_0 = arith.constant 0 : i32
    return %arg0, %c0_i32 : i32, i32
  }
  func.func @transform_3(%arg0: i32) -> (i32, i32) {
    %c0_i32 = arith.constant 0 : i32
    %c0_i32_0 = arith.constant 0 : i32
    return %arg0, %c0_i32 : i32, i32
  }
  func.func @transform_4(%arg0: i32) -> (i32, i32) {
    %c0_i32 = arith.constant 0 : i32
    %c0_i32_0 = arith.constant 0 : i32
    %c0_i32_1 = arith.constant 0 : i32
    return %c0_i32, %c0_i32_0 : i32, i32
  }
  func.func @transform_5(%arg0: i32) -> (i32, i32) {
    %c0_i32 = arith.constant 0 : i32
    %c0_i32_0 = arith.constant 0 : i32
    %c0_i32_1 = arith.constant 0 : i32
    return %c0_i32, %c0_i32_0 : i32, i32
  }
  func.func @transform_6(%arg0: i32) -> (i32, i32) {
    %c0_i32 = arith.constant 0 : i32
    %c0_i32_0 = arith.constant 0 : i32
    %c0_i32_1 = arith.constant 0 : i32
    return %c0_i32, %c0_i32_0 : i32, i32
  }
  func.func @transform_7(%arg0: i32) -> (i32, i32) {
    %c0_i32 = arith.constant 0 : i32
    %c0_i32_0 = arith.constant 0 : i32
    return %arg0, %c0_i32 : i32, i32
  }
  func.func @transform_8(%arg0: i32) -> (i32, i32) {
    %c0_i32 = arith.constant 0 : i32
    %c0_i32_0 = arith.constant 0 : i32
    return %arg0, %c0_i32 : i32, i32
  }
}

</mosaic_0001>

<llo_original>
// kernel: encoder_lstm_forward.3
$region0: #{encoder_lstm_forward.3}
  #allocation0 [shape = 'u32[]', space=smem, size = 0x4, offset = 0x4, fixed_abs, tag = 'smem constant byte address 0x4 - core index']
  #allocation1 [shape = 'u32[144,128]{1,0:T(1,128)}', space=vmem, size = 0x12000, scoped, tag = 'internal scratch']
  #allocation2 [shape = 'f32[64,512]{1,0:T(8,128)}', space=vmem, size = 0x20000, scoped, tag = 'scratch operand']
  %s0 = inlined_call_operand.vmem [shape: f32[1,64,16], index: 0, kind: input, shape index: {}]
  %s1 = inlined_call_operand.vmem [shape: s32[8,1], index: 1, kind: input, shape index: {}]
  %s2 = inlined_call_operand.vmem [shape: f32[8,128], index: 2, kind: input, shape index: {}]
  %s3 = inlined_call_operand.vmem [shape: f32[8,128], index: 3, kind: input, shape index: {}]
  %s4 = inlined_call_operand.vmem [shape: f32[16,512], index: 4, kind: input, shape index: {}]
  %s5 = inlined_call_operand.vmem [shape: f32[128,512], index: 5, kind: input, shape index: {}]
  %s6 = inlined_call_operand.vmem [shape: f32[1,512], index: 6, kind: input, shape index: {}]
  %s7 = inlined_call_operand.vmem [shape: f32[8,128], index: 7, kind: output, shape index: {0}]
  %s8 = inlined_call_operand.vmem [shape: f32[8,128], index: 8, kind: output, shape index: {1}]
  %9 = xla_tuple %s7, %s8
  %s10 = sld [smem:[#allocation0]]
  $region46: #{encoder_lstm_forward.3} parent=0
    _
  %s12 = ssub.s32 1, %s10
  %s13 = scalar_select 0, %s12, %s10
  // Predicated region
  $region2: #{encoder_lstm_forward.3} parent=0 // pred_check
    _
  $region3: #{encoder_lstm_forward.3} parent=0 // pred_check_branch
    %15 = sbr.rel (0) target = $region5
  $region4: #{encoder_lstm_forward.3} parent=0 // pred_region
    _
  $region5: #{encoder_lstm_forward.3} parent=0 // pred_fallthru
    _
  // Predicated region
  $region6: #{encoder_lstm_forward.3} parent=0 // pred_check
    _
  $region7: #{encoder_lstm_forward.3} parent=0 // pred_check_branch
    %17 = sbr.rel (0) target = $region9
  $region8: #{encoder_lstm_forward.3} parent=0 // pred_region
    _
  $region9: #{encoder_lstm_forward.3} parent=0 // pred_fallthru
    _
  // Predicated region
  $region10: #{encoder_lstm_forward.3} parent=0 // pred_check
    _
  $region11: #{encoder_lstm_forward.3} parent=0 // pred_check_branch
    %19 = sbr.rel (0) target = $region13
  $region12: #{encoder_lstm_forward.3} parent=0 // pred_region
    _
  $region13: #{encoder_lstm_forward.3} parent=0 // pred_fallthru
    _
  // Predicated region
  $region14: #{encoder_lstm_forward.3} parent=0 // pred_check
    _
  $region15: #{encoder_lstm_forward.3} parent=0 // pred_check_branch
    %21 = sbr.rel (0) target = $region17
  $region16: #{encoder_lstm_forward.3} parent=0 // pred_region
    _
  $region17: #{encoder_lstm_forward.3} parent=0 // pred_fallthru
    _
  // Predicated region
  $region18: #{encoder_lstm_forward.3} parent=0 // pred_check
    _
  $region19: #{encoder_lstm_forward.3} parent=0 // pred_check_branch
    %23 = sbr.rel (0) target = $region21
  $region20: #{encoder_lstm_forward.3} parent=0 // pred_region
    _
  $region21: #{encoder_lstm_forward.3} parent=0 // pred_fallthru
    _
  // Predicated region
  $region22: #{encoder_lstm_forward.3} parent=0 // pred_check
    _
  $region23: #{encoder_lstm_forward.3} parent=0 // pred_check_branch
    %25 = sbr.rel (0) target = $region25
  $region24: #{encoder_lstm_forward.3} parent=0 // pred_region
    _
  $region25: #{encoder_lstm_forward.3} parent=0 // pred_fallthru
    _
  // Predicated region
  $region26: #{encoder_lstm_forward.3} parent=0 // pred_check
    _
  $region27: #{encoder_lstm_forward.3} parent=0 // pred_check_branch
    %27 = sbr.rel (0) target = $region29
  $region28: #{encoder_lstm_forward.3} parent=0 // pred_region
    _
  $region29: #{encoder_lstm_forward.3} parent=0 // pred_fallthru
    _
  %v28 = vld [vmem:[%s0] sm:$0xff]
  %v29 = vld [vmem:[%s0 + $0x8] sm:$0xff]
  %v30 = vld [vmem:[%s0 + $0x10] sm:$0xff]
  %v31 = vld [vmem:[%s0 + $0x18] sm:$0xff]
  %v32 = vld [vmem:[%s0 + $0x20] sm:$0xff]
  %v33 = vld [vmem:[%s0 + $0x28] sm:$0xff]
  %v34 = vld [vmem:[%s0 + $0x30] sm:$0xff]
  %v35 = vld [vmem:[%s0 + $0x38] sm:$0xff]
  %v36 = vld [vmem:[%s4] sm:$0xff]
  %v37 = vld [vmem:[%s4 + $0x8] sm:$0xff]
  %v38 = vld [vmem:[%s4 + $0x10] sm:$0xff]
  %v39 = vld [vmem:[%s4 + $0x18] sm:$0xff]
  %v40 = vld [vmem:[%s4 + $0x20] sm:$0xff]
  %v41 = vld [vmem:[%s4 + $0x28] sm:$0xff]
  %v42 = vld [vmem:[%s4 + $0x30] sm:$0xff]
  %v43 = vld [vmem:[%s4 + $0x38] sm:$0xff]
  %v44 = vld [vmem:[%s6] sm:$0xf]
  %v46 = vlaneseq
  %v47 = vshrl.u32 %v46, 7
  %v48 = vsub.s32 0, %v47
  %v49 = vrot.slane %v44, %v48
  %v50 = vlaneseq
  %v51 = vshrl.u32 %v50, 7
  %v52 = vsub.s32 1, %v51
  %v53 = vrot.slane %v44, %v52
  %v54 = vlaneseq
  %v55 = vshrl.u32 %v54, 7
  %v56 = vsub.s32 2, %v55
  %v57 = vrot.slane %v44, %v56
  %v58 = vlaneseq
  %v59 = vshrl.u32 %v58, 7
  %v60 = vsub.s32 3, %v59
  %v61 = vrot.slane %v44, %v60
  %vm66 = vcmask 130048
  %v68 = vsel %vm66, %v28, 0
  %v71 = vsel %vm66, %v29, 0
  %v74 = vsel %vm66, %v30, 0
  %v77 = vsel %vm66, %v31, 0
  %v80 = vsel %vm66, %v32, 0
  %v83 = vsel %vm66, %v33, 0
  %v86 = vsel %vm66, %v34, 0
  %v89 = vsel %vm66, %v35, 0
  %91 = vmatprep.subr.mxu0 %v37
  %92 = vmatpush1.msra.mxu0 %v36
  %93 = vmatprep.subr.mxu0 %v41
  %94 = vmatpush1.msra.mxu0 %v40
  %95 = vmatprep.subr.mxu0 0.0
  %96 = vmatpush1.msra.mxu0 0.0
  %97 = vmatprep.subr.mxu0 0.0
  %98 = vmatpush1.msra.mxu0 0.0
  %99 = vmatprep.subr.mxu0 0.0
  %100 = vmatpush1.msra.mxu0 0.0
  %101 = vmatprep.subr.mxu0 0.0
  %102 = vmatpush1.msra.mxu0 0.0
  %103 = vmatprep.subr.mxu0 0.0
  %104 = vmatpush1.msra.mxu0 0.0
  %105 = vmatprep.subr.mxu0 0.0
  %106 = vmatpush1.msra.mxu0 0.0
  %107 = vmatprep.subr.mxu0 0.0
  %108 = vmatpush1.msra.mxu0 0.0
  %109 = vmatprep.subr.mxu0 0.0
  %110 = vmatpush1.msra.mxu0 0.0
  %111 = vmatprep.subr.mxu0 0.0
  %112 = vmatpush1.msra.mxu0 0.0
  %113 = vmatprep.subr.mxu0 0.0
  %114 = vmatpush1.msra.mxu0 0.0
  %115 = vmatprep.subr.mxu0 0.0
  %116 = vmatpush1.msra.mxu0 0.0
  %117 = vmatprep.subr.mxu0 0.0
  %118 = vmatpush1.msra.mxu0 0.0
  %119 = vmatprep.subr.mxu0 0.0
  %120 = vmatpush1.msra.mxu0 0.0
  %121 = vmatprep.subr.mxu0 0.0
  %122 = vmatpush1.msra.mxu0 0.0
  %123 = vmatprep.subr.mxu0 0.0
  %124 = vmatpush1.msra.mxu0 0.0
  %125 = vmatprep.subr.mxu0 0.0
  %126 = vmatpush1.msra.mxu0 0.0
  %127 = vmatprep.subr.mxu0 0.0
  %128 = vmatpush1.msra.mxu0 0.0
  %129 = vmatprep.subr.mxu0 0.0
  %130 = vmatpush1.msra.mxu0 0.0
  %131 = vmatprep.subr.mxu0 0.0
  %132 = vmatpush1.msra.mxu0 0.0
  %133 = vmatprep.subr.mxu0 0.0
  %134 = vmatpush1.msra.mxu0 0.0
  %135 = vmatprep.subr.mxu0 0.0
  %136 = vmatpush1.msra.mxu0 0.0
  %137 = vmatprep.subr.mxu0 0.0
  %138 = vmatpush1.msra.mxu0 0.0
  %139 = vmatprep.subr.mxu0 0.0
  %140 = vmatpush1.msra.mxu0 0.0
  %141 = vmatprep.subr.mxu0 0.0
  %142 = vmatpush1.msra.mxu0 0.0
  %143 = vmatprep.subr.mxu0 0.0
  %144 = vmatpush1.msra.mxu0 0.0
  %145 = vmatprep.subr.mxu0 0.0
  %146 = vmatpush1.msra.mxu0 0.0
  %147 = vmatprep.subr.mxu0 0.0
  %148 = vmatpush1.msra.mxu0 0.0
  %149 = vmatprep.subr.mxu0 0.0
  %150 = vmatpush1.msra.mxu0 0.0
  %151 = vmatprep.subr.mxu0 0.0
  %152 = vmatpush1.msra.mxu0 0.0
  %153 = vmatprep.subr.mxu0 0.0
  %154 = vmatpush1.msra.mxu0 0.0
  %155 = vmatprep.mubr.f32.mxu0 0.0
  %156 = vmatmul.mubr.f32.gmra.mrb[0].mxu0 %v68
  %v157 = vpop.f32.mrb[0].mxu0
  %v158 = vadd.f32 %v49, %v157
  %v159 = vpop.f32.mrb[0].mxu0
  %v160 = vadd.f32 %v53, %v159
  %161 = vmatprep.mubr.f32.mxu0 0.0
  %162 = vmatmul.mubr.f32.gmra.mrb[0].mxu0 %v71
  %v163 = vpop.f32.mrb[0].mxu0
  %v164 = vadd.f32 %v49, %v163
  %v165 = vpop.f32.mrb[0].mxu0
  %v166 = vadd.f32 %v53, %v165
  %167 = vmatprep.mubr.f32.mxu0 0.0
  %168 = vmatmul.mubr.f32.gmra.mrb[0].mxu0 %v74
  %v169 = vpop.f32.mrb[0].mxu0
  %v170 = vadd.f32 %v49, %v169
  %v171 = vpop.f32.mrb[0].mxu0
  %v172 = vadd.f32 %v53, %v171
  %173 = vmatprep.mubr.f32.mxu0 0.0
  %174 = vmatmul.mubr.f32.gmra.mrb[0].mxu0 %v77
  %v175 = vpop.f32.mrb[0].mxu0
  %v176 = vadd.f32 %v49, %v175
  %v177 = vpop.f32.mrb[0].mxu0
  %v178 = vadd.f32 %v53, %v177
  %179 = vmatprep.mubr.f32.mxu0 0.0
  %180 = vmatmul.mubr.f32.gmra.mrb[0].mxu0 %v80
  %v181 = vpop.f32.mrb[0].mxu0
  %v182 = vadd.f32 %v49, %v181
  %v183 = vpop.f32.mrb[0].mxu0
  %v184 = vadd.f32 %v53, %v183
  %185 = vmatprep.mubr.f32.mxu0 0.0
  %186 = vmatmul.mubr.f32.gmra.mrb[0].mxu0 %v83
  %v187 = vpop.f32.mrb[0].mxu0
  %v188 = vadd.f32 %v49, %v187
  %v189 = vpop.f32.mrb[0].mxu0
  %v190 = vadd.f32 %v53, %v189
  %191 = vmatprep.mubr.f32.mxu0 0.0
  %192 = vmatmul.mubr.f32.gmra.mrb[0].mxu0 %v86
  %v193 = vpop.f32.mrb[0].mxu0
  %v194 = vadd.f32 %v49, %v193
  %v195 = vpop.f32.mrb[0].mxu0
  %v196 = vadd.f32 %v53, %v195
  %197 = vmatprep.mubr.f32.mxu0 0.0
  %198 = vmatmul.mubr.f32.gmra.mrb[0].mxu0 %v89
  %v199 = vpop.f32.mrb[0].mxu0
  %v200 = vadd.f32 %v49, %v199
  %v201 = vpop.f32.mrb[0].mxu0
  %v202 = vadd.f32 %v53, %v201
  %203 = vdwg.mxu0
  %204 = vmatprep.subr.mxu0 %v39
  %205 = vmatpush1.msra.mxu0 %v38
  %206 = vmatprep.subr.mxu0 %v43
  %207 = vmatpush1.msra.mxu0 %v42
  %208 = vmatprep.subr.mxu0 0.0
  %209 = vmatpush1.msra.mxu0 0.0
  %210 = vmatprep.subr.mxu0 0.0
  %211 = vmatpush1.msra.mxu0 0.0
  %212 = vmatprep.subr.mxu0 0.0
  %213 = vmatpush1.msra.mxu0 0.0
  %214 = vmatprep.subr.mxu0 0.0
  %215 = vmatpush1.msra.mxu0 0.0
  %216 = vmatprep.subr.mxu0 0.0
  %217 = vmatpush1.msra.mxu0 0.0
  %218 = vmatprep.subr.mxu0 0.0
  %219 = vmatpush1.msra.mxu0 0.0
  %220 = vmatprep.subr.mxu0 0.0
  %221 = vmatpush1.msra.mxu0 0.0
  %222 = vmatprep.subr.mxu0 0.0
  %223 = vmatpush1.msra.mxu0 0.0
  %224 = vmatprep.subr.mxu0 0.0
  %225 = vmatpush1.msra.mxu0 0.0
  %226 = vmatprep.subr.mxu0 0.0
  %227 = vmatpush1.msra.mxu0 0.0
  %228 = vmatprep.subr.mxu0 0.0
  %229 = vmatpush1.msra.mxu0 0.0
  %230 = vmatprep.subr.mxu0 0.0
  %231 = vmatpush1.msra.mxu0 0.0
  %232 = vmatprep.subr.mxu0 0.0
  %233 = vmatpush1.msra.mxu0 0.0
  %234 = vmatprep.subr.mxu0 0.0
  %235 = vmatpush1.msra.mxu0 0.0
  %236 = vmatprep.subr.mxu0 0.0
  %237 = vmatpush1.msra.mxu0 0.0
  %238 = vmatprep.subr.mxu0 0.0
  %239 = vmatpush1.msra.mxu0 0.0
  %240 = vmatprep.subr.mxu0 0.0
  %241 = vmatpush1.msra.mxu0 0.0
  %242 = vmatprep.subr.mxu0 0.0
  %243 = vmatpush1.msra.mxu0 0.0
  %244 = vmatprep.subr.mxu0 0.0
  %245 = vmatpush1.msra.mxu0 0.0
  %246 = vmatprep.subr.mxu0 0.0
  %247 = vmatpush1.msra.mxu0 0.0
  %248 = vmatprep.subr.mxu0 0.0
  %249 = vmatpush1.msra.mxu0 0.0
  %250 = vmatprep.subr.mxu0 0.0
  %251 = vmatpush1.msra.mxu0 0.0
  %252 = vmatprep.subr.mxu0 0.0
  %253 = vmatpush1.msra.mxu0 0.0
  %254 = vmatprep.subr.mxu0 0.0
  %255 = vmatpush1.msra.mxu0 0.0
  %256 = vmatprep.subr.mxu0 0.0
  %257 = vmatpush1.msra.mxu0 0.0
  %258 = vmatprep.subr.mxu0 0.0
  %259 = vmatpush1.msra.mxu0 0.0
  %260 = vmatprep.subr.mxu0 0.0
  %261 = vmatpush1.msra.mxu0 0.0
  %262 = vmatprep.subr.mxu0 0.0
  %263 = vmatpush1.msra.mxu0 0.0
  %264 = vmatprep.subr.mxu0 0.0
  %265 = vmatpush1.msra.mxu0 0.0
  %266 = vmatprep.subr.mxu0 0.0
  %267 = vmatpush1.msra.mxu0 0.0
  %268 = vmatprep.mubr.f32.mxu0 0.0
  %269 = vmatmul.mubr.f32.gmra.mrb[0].mxu0 %v68
  %v270 = vpop.f32.mrb[0].mxu0
  %v271 = vadd.f32 %v57, %v270
  %v272 = vpop.f32.mrb[0].mxu0
  %v273 = vadd.f32 %v61, %v272
  %274 = vmatprep.mubr.f32.mxu0 0.0
  %275 = vmatmul.mubr.f32.gmra.mrb[0].mxu0 %v71
  %v276 = vpop.f32.mrb[0].mxu0
  %v277 = vadd.f32 %v57, %v276
  %v278 = vpop.f32.mrb[0].mxu0
  %v279 = vadd.f32 %v61, %v278
  %280 = vmatprep.mubr.f32.mxu0 0.0
  %281 = vmatmul.mubr.f32.gmra.mrb[0].mxu0 %v74
  %v282 = vpop.f32.mrb[0].mxu0
  %v283 = vadd.f32 %v57, %v282
  %v284 = vpop.f32.mrb[0].mxu0
  %v285 = vadd.f32 %v61, %v284
  %286 = vmatprep.mubr.f32.mxu0 0.0
  %287 = vmatmul.mubr.f32.gmra.mrb[0].mxu0 %v77
  %v288 = vpop.f32.mrb[0].mxu0
  %v289 = vadd.f32 %v57, %v288
  %v290 = vpop.f32.mrb[0].mxu0
  %v291 = vadd.f32 %v61, %v290
  %292 = vmatprep.mubr.f32.mxu0 0.0
  %293 = vmatmul.mubr.f32.gmra.mrb[0].mxu0 %v80
  %v294 = vpop.f32.mrb[0].mxu0
  %v295 = vadd.f32 %v57, %v294
  %v296 = vpop.f32.mrb[0].mxu0
  %v297 = vadd.f32 %v61, %v296
  %298 = vmatprep.mubr.f32.mxu0 0.0
  %299 = vmatmul.mubr.f32.gmra.mrb[0].mxu0 %v83
  %v300 = vpop.f32.mrb[0].mxu0
  %v301 = vadd.f32 %v57, %v300
  %v302 = vpop.f32.mrb[0].mxu0
  %v303 = vadd.f32 %v61, %v302
  %304 = vmatprep.mubr.f32.mxu0 0.0
  %305 = vmatmul.mubr.f32.gmra.mrb[0].mxu0 %v86
  %v306 = vpop.f32.mrb[0].mxu0
  %v307 = vadd.f32 %v57, %v306
  %v308 = vpop.f32.mrb[0].mxu0
  %v309 = vadd.f32 %v61, %v308
  %310 = vmatprep.mubr.f32.mxu0 0.0
  %311 = vmatmul.mubr.f32.gmra.mrb[0].mxu0 %v89
  %v312 = vpop.f32.mrb[0].mxu0
  %v313 = vadd.f32 %v57, %v312
  %v314 = vpop.f32.mrb[0].mxu0
  %v315 = vadd.f32 %v61, %v314
  %316 = vdwg.mxu0
  %317 = vst [vmem:[#allocation2] sm:$0xff] %v158
  %318 = vst [vmem:[#allocation2 + $0x8] sm:$0xff] %v160
  %319 = vst [vmem:[#allocation2 + $0x10] sm:$0xff] %v271
  %320 = vst [vmem:[#allocation2 + $0x18] sm:$0xff] %v273
  %321 = vst [vmem:[#allocation2 + $0x20] sm:$0xff] %v164
  %322 = vst [vmem:[#allocation2 + $0x28] sm:$0xff] %v166
  %323 = vst [vmem:[#allocation2 + $0x30] sm:$0xff] %v277
  %324 = vst [vmem:[#allocation2 + $0x38] sm:$0xff] %v279
  %325 = vst [vmem:[#allocation2 + $0x40] sm:$0xff] %v170
  %326 = vst [vmem:[#allocation2 + $0x48] sm:$0xff] %v172
  %327 = vst [vmem:[#allocation2 + $0x50] sm:$0xff] %v283
  %328 = vst [vmem:[#allocation2 + $0x58] sm:$0xff] %v285
  %329 = vst [vmem:[#allocation2 + $0x60] sm:$0xff] %v176
  %330 = vst [vmem:[#allocation2 + $0x68] sm:$0xff] %v178
  %331 = vst [vmem:[#allocation2 + $0x70] sm:$0xff] %v289
  %332 = vst [vmem:[#allocation2 + $0x78] sm:$0xff] %v291
  %333 = vst [vmem:[#allocation2 + $0x80] sm:$0xff] %v182
  %334 = vst [vmem:[#allocation2 + $0x88] sm:$0xff] %v184
  %335 = vst [vmem:[#allocation2 + $0x90] sm:$0xff] %v295
  %336 = vst [vmem:[#allocation2 + $0x98] sm:$0xff] %v297
  %337 = vst [vmem:[#allocation2 + $0xa0] sm:$0xff] %v188
  %338 = vst [vmem:[#allocation2 + $0xa8] sm:$0xff] %v190
  %339 = vst [vmem:[#allocation2 + $0xb0] sm:$0xff] %v301
  %340 = vst [vmem:[#allocation2 + $0xb8] sm:$0xff] %v303
  %341 = vst [vmem:[#allocation2 + $0xc0] sm:$0xff] %v194
  %342 = vst [vmem:[#allocation2 + $0xc8] sm:$0xff] %v196
  %343 = vst [vmem:[#allocation2 + $0xd0] sm:$0xff] %v307
  %344 = vst [vmem:[#allocation2 + $0xd8] sm:$0xff] %v309
  %345 = vst [vmem:[#allocation2 + $0xe0] sm:$0xff] %v200
  %346 = vst [vmem:[#allocation2 + $0xe8] sm:$0xff] %v202
  %347 = vst [vmem:[#allocation2 + $0xf0] sm:$0xff] %v313
  %348 = vst [vmem:[#allocation2 + $0xf8] sm:$0xff] %v315
  %v349 = vld [vmem:[%s1] sm:$0xff]
  %v350 = vld [vmem:[%s5] sm:$0xff]
  %v351 = vld [vmem:[%s5 + $0x8] sm:$0xff]
  %v352 = vld [vmem:[%s5 + $0x10] sm:$0xff]
  %v353 = vld [vmem:[%s5 + $0x18] sm:$0xff]
  %v354 = vld [vmem:[%s5 + $0x20] sm:$0xff]
  %v355 = vld [vmem:[%s5 + $0x28] sm:$0xff]
  %v356 = vld [vmem:[%s5 + $0x30] sm:$0xff]
  %v357 = vld [vmem:[%s5 + $0x38] sm:$0xff]
  %v358 = vld [vmem:[%s5 + $0x40] sm:$0xff]
  %v359 = vld [vmem:[%s5 + $0x48] sm:$0xff]
  %v360 = vld [vmem:[%s5 + $0x50] sm:$0xff]
  %v361 = vld [vmem:[%s5 + $0x58] sm:$0xff]
  %v362 = vld [vmem:[%s5 + $0x60] sm:$0xff]
  %v363 = vld [vmem:[%s5 + $0x68] sm:$0xff]
  %v364 = vld [vmem:[%s5 + $0x70] sm:$0xff]
  %v365 = vld [vmem:[%s5 + $0x78] sm:$0xff]
  %v366 = vld [vmem:[%s5 + $0x80] sm:$0xff]
  %v367 = vld [vmem:[%s5 + $0x88] sm:$0xff]
  %v368 = vld [vmem:[%s5 + $0x90] sm:$0xff]
  %v369 = vld [vmem:[%s5 + $0x98] sm:$0xff]
  %v370 = vld [vmem:[%s5 + $0xa0] sm:$0xff]
  %v371 = vld [vmem:[%s5 + $0xa8] sm:$0xff]
  %v372 = vld [vmem:[%s5 + $0xb0] sm:$0xff]
  %v373 = vld [vmem:[%s5 + $0xb8] sm:$0xff]
  %v374 = vld [vmem:[%s5 + $0xc0] sm:$0xff]
  %v375 = vld [vmem:[%s5 + $0xc8] sm:$0xff]
  %v376 = vld [vmem:[%s5 + $0xd0] sm:$0xff]
  %v377 = vld [vmem:[%s5 + $0xd8] sm:$0xff]
  %v378 = vld [vmem:[%s5 + $0xe0] sm:$0xff]
  %v379 = vld [vmem:[%s5 + $0xe8] sm:$0xff]
  %v380 = vld [vmem:[%s5 + $0xf0] sm:$0xff]
  %v381 = vld [vmem:[%s5 + $0xf8] sm:$0xff]
  %v382 = vld [vmem:[%s5 + $0x100] sm:$0xff]
  %v383 = vld [vmem:[%s5 + $0x108] sm:$0xff]
  %v384 = vld [vmem:[%s5 + $0x110] sm:$0xff]
  %v385 = vld [vmem:[%s5 + $0x118] sm:$0xff]
  %v386 = vld [vmem:[%s5 + $0x120] sm:$0xff]
  %v387 = vld [vmem:[%s5 + $0x128] sm:$0xff]
  %v388 = vld [vmem:[%s5 + $0x130] sm:$0xff]
  %v389 = vld [vmem:[%s5 + $0x138] sm:$0xff]
  %v390 = vld [vmem:[%s5 + $0x140] sm:$0xff]
  %v391 = vld [vmem:[%s5 + $0x148] sm:$0xff]
  %v392 = vld [vmem:[%s5 + $0x150] sm:$0xff]
  %v393 = vld [vmem:[%s5 + $0x158] sm:$0xff]
  %v394 = vld [vmem:[%s5 + $0x160] sm:$0xff]
  %v395 = vld [vmem:[%s5 + $0x168] sm:$0xff]
  %v396 = vld [vmem:[%s5 + $0x170] sm:$0xff]
  %v397 = vld [vmem:[%s5 + $0x178] sm:$0xff]
  %v398 = vld [vmem:[%s5 + $0x180] sm:$0xff]
  %v399 = vld [vmem:[%s5 + $0x188] sm:$0xff]
  %v400 = vld [vmem:[%s5 + $0x190] sm:$0xff]
  %v401 = vld [vmem:[%s5 + $0x198] sm:$0xff]
  %v402 = vld [vmem:[%s5 + $0x1a0] sm:$0xff]
  %v403 = vld [vmem:[%s5 + $0x1a8] sm:$0xff]
  %v404 = vld [vmem:[%s5 + $0x1b0] sm:$0xff]
  %v405 = vld [vmem:[%s5 + $0x1b8] sm:$0xff]
  %v406 = vld [vmem:[%s5 + $0x1c0] sm:$0xff]
  %v407 = vld [vmem:[%s5 + $0x1c8] sm:$0xff]
  %v408 = vld [vmem:[%s5 + $0x1d0] sm:$0xff]
  %v409 = vld [vmem:[%s5 + $0x1d8] sm:$0xff]
  %v410 = vld [vmem:[%s5 + $0x1e0] sm:$0xff]
  %v411 = vld [vmem:[%s5 + $0x1e8] sm:$0xff]
  %v412 = vld [vmem:[%s5 + $0x1f0] sm:$0xff]
  %v413 = vld [vmem:[%s5 + $0x1f8] sm:$0xff]
  %v414 = vld [vmem:[%s2] sm:$0xff]
  %v415 = vld [vmem:[%s3] sm:$0xff]
  %s416 = smul.u32 0, 4
  %s417 = smul.addr %s416, 8
  %s418 = scalar_lea.vmem [#allocation2], %s417
  %v419 = vld [vmem:[%s418] sm:$0xff]
  %v420 = vld [vmem:[%s418 + $0x8] sm:$0xff]
  %v421 = vld [vmem:[%s418 + $0x10] sm:$0xff]
  %v422 = vld [vmem:[%s418 + $0x18] sm:$0xff]
  %423 = vmatprep.subr.mxu0 %v351
  %424 = vmatpush1.msra.mxu0 %v350
  %425 = vmatprep.subr.mxu0 %v355
  %426 = vmatpush1.msra.mxu0 %v354
  %427 = vmatprep.subr.mxu0 %v359
  %428 = vmatpush1.msra.mxu0 %v358
  %429 = vmatprep.subr.mxu0 %v363
  %430 = vmatpush1.msra.mxu0 %v362
  %431 = vmatprep.subr.mxu0 %v367
  %432 = vmatpush1.msra.mxu0 %v366
  %433 = vmatprep.subr.mxu0 %v371
  %434 = vmatpush1.msra.mxu0 %v370
  %435 = vmatprep.subr.mxu0 %v375
  %436 = vmatpush1.msra.mxu0 %v374
  %437 = vmatprep.subr.mxu0 %v379
  %438 = vmatpush1.msra.mxu0 %v378
  %439 = vmatprep.subr.mxu0 %v383
  %440 = vmatpush1.msra.mxu0 %v382
  %441 = vmatprep.subr.mxu0 %v387
  %442 = vmatpush1.msra.mxu0 %v386
  %443 = vmatprep.subr.mxu0 %v391
  %444 = vmatpush1.msra.mxu0 %v390
  %445 = vmatprep.subr.mxu0 %v395
  %446 = vmatpush1.msra.mxu0 %v394
  %447 = vmatprep.subr.mxu0 %v399
  %448 = vmatpush1.msra.mxu0 %v398
  %449 = vmatprep.subr.mxu0 %v403
  %450 = vmatpush1.msra.mxu0 %v402
  %451 = vmatprep.subr.mxu0 %v407
  %452 = vmatpush1.msra.mxu0 %v406
  %453 = vmatprep.subr.mxu0 %v411
  %454 = vmatpush1.msra.mxu0 %v410
  %455 = vmatprep.subr.mxu0 0.0
  %456 = vmatpush1.msra.mxu0 0.0
  %457 = vmatprep.subr.mxu0 0.0
  %458 = vmatpush1.msra.mxu0 0.0
  %459 = vmatprep.subr.mxu0 0.0
  %460 = vmatpush1.msra.mxu0 0.0
  %461 = vmatprep.subr.mxu0 0.0
  %462 = vmatpush1.msra.mxu0 0.0
  %463 = vmatprep.subr.mxu0 0.0
  %464 = vmatpush1.msra.mxu0 0.0
  %465 = vmatprep.subr.mxu0 0.0
  %466 = vmatpush1.msra.mxu0 0.0
  %467 = vmatprep.subr.mxu0 0.0
  %468 = vmatpush1.msra.mxu0 0.0
  %469 = vmatprep.subr.mxu0 0.0
  %470 = vmatpush1.msra.mxu0 0.0
  %471 = vmatprep.subr.mxu0 0.0
  %472 = vmatpush1.msra.mxu0 0.0
  %473 = vmatprep.subr.mxu0 0.0
  %474 = vmatpush1.msra.mxu0 0.0
  %475 = vmatprep.subr.mxu0 0.0
  %476 = vmatpush1.msra.mxu0 0.0
  %477 = vmatprep.subr.mxu0 0.0
  %478 = vmatpush1.msra.mxu0 0.0
  %479 = vmatprep.subr.mxu0 0.0
  %480 = vmatpush1.msra.mxu0 0.0
  %481 = vmatprep.subr.mxu0 0.0
  %482 = vmatpush1.msra.mxu0 0.0
  %483 = vmatprep.subr.mxu0 0.0
  %484 = vmatpush1.msra.mxu0 0.0
  %485 = vmatprep.subr.mxu0 0.0
  %486 = vmatpush1.msra.mxu0 0.0
  %487 = vmatprep.mubr.f32.mxu0 0.0
  %488 = vmatmul.mubr.f32.gmra.mrb[0].mxu0 %v414
  %v489 = vpop.f32.mrb[0].mxu0
  %v490 = vadd.f32 0.0, %v489
  %v491 = vpop.f32.mrb[0].mxu0
  %v492 = vadd.f32 0.0, %v491
  %493 = vdwg.mxu0
  %494 = vmatprep.subr.mxu0 %v353
  %495 = vmatpush1.msra.mxu0 %v352
  %496 = vmatprep.subr.mxu0 %v357
  %497 = vmatpush1.msra.mxu0 %v356
  %498 = vmatprep.subr.mxu0 %v361
  %499 = vmatpush1.msra.mxu0 %v360
  %500 = vmatprep.subr.mxu0 %v365
  %501 = vmatpush1.msra.mxu0 %v364
  %502 = vmatprep.subr.mxu0 %v369
  %503 = vmatpush1.msra.mxu0 %v368
  %504 = vmatprep.subr.mxu0 %v373
  %505 = vmatpush1.msra.mxu0 %v372
  %506 = vmatprep.subr.mxu0 %v377
  %507 = vmatpush1.msra.mxu0 %v376
  %508 = vmatprep.subr.mxu0 %v381
  %509 = vmatpush1.msra.mxu0 %v380
  %510 = vmatprep.subr.mxu0 %v385
  %511 = vmatpush1.msra.mxu0 %v384
  %512 = vmatprep.subr.mxu0 %v389
  %513 = vmatpush1.msra.mxu0 %v388
  %514 = vmatprep.subr.mxu0 %v393
  %515 = vmatpush1.msra.mxu0 %v392
  %516 = vmatprep.subr.mxu0 %v397
  %517 = vmatpush1.msra.mxu0 %v396
  %518 = vmatprep.subr.mxu0 %v401
  %519 = vmatpush1.msra.mxu0 %v400
  %520 = vmatprep.subr.mxu0 %v405
  %521 = vmatpush1.msra.mxu0 %v404
  %522 = vmatprep.subr.mxu0 %v409
  %523 = vmatpush1.msra.mxu0 %v408
  %524 = vmatprep.subr.mxu0 %v413
  %525 = vmatpush1.msra.mxu0 %v412
  %526 = vmatprep.subr.mxu0 0.0
  %527 = vmatpush1.msra.mxu0 0.0
  %528 = vmatprep.subr.mxu0 0.0
  %529 = vmatpush1.msra.mxu0 0.0
  %530 = vmatprep.subr.mxu0 0.0
  %531 = vmatpush1.msra.mxu0 0.0
  %532 = vmatprep.subr.mxu0 0.0
  %533 = vmatpush1.msra.mxu0 0.0
  %534 = vmatprep.subr.mxu0 0.0
  %535 = vmatpush1.msra.mxu0 0.0
  %536 = vmatprep.subr.mxu0 0.0
  %537 = vmatpush1.msra.mxu0 0.0
  %538 = vmatprep.subr.mxu0 0.0
  %539 = vmatpush1.msra.mxu0 0.0
  %540 = vmatprep.subr.mxu0 0.0
  %541 = vmatpush1.msra.mxu0 0.0
  %542 = vmatprep.subr.mxu0 0.0
  %543 = vmatpush1.msra.mxu0 0.0
  %544 = vmatprep.subr.mxu0 0.0
  %545 = vmatpush1.msra.mxu0 0.0
  %546 = vmatprep.subr.mxu0 0.0
  %547 = vmatpush1.msra.mxu0 0.0
  %548 = vmatprep.subr.mxu0 0.0
  %549 = vmatpush1.msra.mxu0 0.0
  %550 = vmatprep.subr.mxu0 0.0
  %551 = vmatpush1.msra.mxu0 0.0
  %552 = vmatprep.subr.mxu0 0.0
  %553 = vmatpush1.msra.mxu0 0.0
  %554 = vmatprep.subr.mxu0 0.0
  %555 = vmatpush1.msra.mxu0 0.0
  %556 = vmatprep.subr.mxu0 0.0
  %557 = vmatpush1.msra.mxu0 0.0
  %558 = vmatprep.mubr.f32.mxu0 0.0
  %559 = vmatmul.mubr.f32.gmra.mrb[0].mxu0 %v414
  %v560 = vpop.f32.mrb[0].mxu0
  %v561 = vadd.f32 0.0, %v560
  %v562 = vpop.f32.mrb[0].mxu0
  %v563 = vadd.f32 0.0, %v562
  %564 = vdwg.mxu0
  %v565 = vadd.f32 %v419, %v490
  %v566 = vadd.f32 %v420, %v492
  %v567 = vadd.f32 %v421, %v561
  %v568 = vadd.f32 %v422, %v563
  %v569 = vxor.u32 %v565, 2147483648
  %v570 = vmul.f32 %v569, 1.442695
  %v571 = vpow.pop %v570
  %v572 = vadd.f32 %v571, 1.0
  %v573 = vrcp.pop %v572
  %v574 = vmul.f32 1.0, %v573
  %v575 = vxor.u32 %v566, 2147483648
  %v576 = vmul.f32 %v575, 1.442695
  %v577 = vpow.pop %v576
  %v578 = vadd.f32 %v577, 1.0
  %v579 = vrcp.pop %v578
  %v580 = vmul.f32 1.0, %v579
  %v581 = vtanh.pop %v567
  %v582 = vxor.u32 %v568, 2147483648
  %v583 = vmul.f32 %v582, 1.442695
  %v584 = vpow.pop %v583
  %v585 = vadd.f32 %v584, 1.0
  %v586 = vrcp.pop %v585
  %v587 = vmul.f32 1.0, %v586
  %v588 = vmul.f32 %v580, %v415
  %v589 = vmul.f32 %v574, %v581
  %v590 = vadd.f32 %v588, %v589
  %v591 = vtanh.pop %v590
  %v592 = vmul.f32 %v587, %v591
  %vm593 = vcmp.gt.s32.totalorder %v349, 0
  %v594 = vsel %vm593, 1, 0
  %595 = vset.pattern.permute.xlu0 0
  %596 = vperm.xlu0 %595, %v594
  %v597 = vpop.permute.xlu0 %596
  %vm598 = vcmp.eq.s32.totalorder %v597, 1
  %v599 = vsel %vm598, %v592, %v414
  %v600 = vsel %vm598, %v590, %v415
  %s601 = smul.u32 1, 4
  %s602 = smul.addr %s601, 8
  %s603 = scalar_lea.vmem [#allocation2], %s602
  %v604 = vld [vmem:[%s603] sm:$0xff]
  %v605 = vld [vmem:[%s603 + $0x8] sm:$0xff]
  %v606 = vld [vmem:[%s603 + $0x10] sm:$0xff]
  %v607 = vld [vmem:[%s603 + $0x18] sm:$0xff]
  %608 = vmatprep.subr.mxu0 %v351
  %609 = vmatpush1.msra.mxu0 %v350
  %610 = vmatprep.subr.mxu0 %v355
  %611 = vmatpush1.msra.mxu0 %v354
  %612 = vmatprep.subr.mxu0 %v359
  %613 = vmatpush1.msra.mxu0 %v358
  %614 = vmatprep.subr.mxu0 %v363
  %615 = vmatpush1.msra.mxu0 %v362
  %616 = vmatprep.subr.mxu0 %v367
  %617 = vmatpush1.msra.mxu0 %v366
  %618 = vmatprep.subr.mxu0 %v371
  %619 = vmatpush1.msra.mxu0 %v370
  %620 = vmatprep.subr.mxu0 %v375
  %621 = vmatpush1.msra.mxu0 %v374
  %622 = vmatprep.subr.mxu0 %v379
  %623 = vmatpush1.msra.mxu0 %v378
  %624 = vmatprep.subr.mxu0 %v383
  %625 = vmatpush1.msra.mxu0 %v382
  %626 = vmatprep.subr.mxu0 %v387
  %627 = vmatpush1.msra.mxu0 %v386
  %628 = vmatprep.subr.mxu0 %v391
  %629 = vmatpush1.msra.mxu0 %v390
  %630 = vmatprep.subr.mxu0 %v395
  %631 = vmatpush1.msra.mxu0 %v394
  %632 = vmatprep.subr.mxu0 %v399
  %633 = vmatpush1.msra.mxu0 %v398
  %634 = vmatprep.subr.mxu0 %v403
  %635 = vmatpush1.msra.mxu0 %v402
  %636 = vmatprep.subr.mxu0 %v407
  %637 = vmatpush1.msra.mxu0 %v406
  %638 = vmatprep.subr.mxu0 %v411
  %639 = vmatpush1.msra.mxu0 %v410
  %640 = vmatprep.subr.mxu0 0.0
  %641 = vmatpush1.msra.mxu0 0.0
  %642 = vmatprep.subr.mxu0 0.0
  %643 = vmatpush1.msra.mxu0 0.0
  %644 = vmatprep.subr.mxu0 0.0
  %645 = vmatpush1.msra.mxu0 0.0
  %646 = vmatprep.subr.mxu0 0.0
  %647 = vmatpush1.msra.mxu0 0.0
  %648 = vmatprep.subr.mxu0 0.0
  %649 = vmatpush1.msra.mxu0 0.0
  %650 = vmatprep.subr.mxu0 0.0
  %651 = vmatpush1.msra.mxu0 0.0
  %652 = vmatprep.subr.mxu0 0.0
  %653 = vmatpush1.msra.mxu0 0.0
  %654 = vmatprep.subr.mxu0 0.0
  %655 = vmatpush1.msra.mxu0 0.0
  %656 = vmatprep.subr.mxu0 0.0
  %657 = vmatpush1.msra.mxu0 0.0
  %658 = vmatprep.subr.mxu0 0.0
  %659 = vmatpush1.msra.mxu0 0.0
  %660 = vmatprep.subr.mxu0 0.0
  %661 = vmatpush1.msra.mxu0 0.0
  %662 = vmatprep.subr.mxu0 0.0
  %663 = vmatpush1.msra.mxu0 0.0
  %664 = vmatprep.subr.mxu0 0.0
  %665 = vmatpush1.msra.mxu0 0.0
  %666 = vmatprep.subr.mxu0 0.0
  %667 = vmatpush1.msra.mxu0 0.0
  %668 = vmatprep.subr.mxu0 0.0
  %669 = vmatpush1.msra.mxu0 0.0
  %670 = vmatprep.subr.mxu0 0.0
  %671 = vmatpush1.msra.mxu0 0.0
  %672 = vmatprep.mubr.f32.mxu0 0.0
  %673 = vmatmul.mubr.f32.gmra.mrb[0].mxu0 %v599
  %v674 = vpop.f32.mrb[0].mxu0
  %v675 = vadd.f32 0.0, %v674
  %v676 = vpop.f32.mrb[0].mxu0
  %v677 = vadd.f32 0.0, %v676
  %678 = vdwg.mxu0
  %679 = vmatprep.subr.mxu0 %v353
  %680 = vmatpush1.msra.mxu0 %v352
  %681 = vmatprep.subr.mxu0 %v357
  %682 = vmatpush1.msra.mxu0 %v356
  %683 = vmatprep.subr.mxu0 %v361
  %684 = vmatpush1.msra.mxu0 %v360
  %685 = vmatprep.subr.mxu0 %v365
  %686 = vmatpush1.msra.mxu0 %v364
  %687 = vmatprep.subr.mxu0 %v369
  %688 = vmatpush1.msra.mxu0 %v368
  %689 = vmatprep.subr.mxu0 %v373
  %690 = vmatpush1.msra.mxu0 %v372
  %691 = vmatprep.subr.mxu0 %v377
  %692 = vmatpush1.msra.mxu0 %v376
  %693 = vmatprep.subr.mxu0 %v381
  %694 = vmatpush1.msra.mxu0 %v380
  %695 = vmatprep.subr.mxu0 %v385
  %696 = vmatpush1.msra.mxu0 %v384
  %697 = vmatprep.subr.mxu0 %v389
  %698 = vmatpush1.msra.mxu0 %v388
  %699 = vmatprep.subr.mxu0 %v393
  %700 = vmatpush1.msra.mxu0 %v392
  %701 = vmatprep.subr.mxu0 %v397
  %702 = vmatpush1.msra.mxu0 %v396
  %703 = vmatprep.subr.mxu0 %v401
  %704 = vmatpush1.msra.mxu0 %v400
  %705 = vmatprep.subr.mxu0 %v405
  %706 = vmatpush1.msra.mxu0 %v404
  %707 = vmatprep.subr.mxu0 %v409
  %708 = vmatpush1.msra.mxu0 %v408
  %709 = vmatprep.subr.mxu0 %v413
  %710 = vmatpush1.msra.mxu0 %v412
  %711 = vmatprep.subr.mxu0 0.0
  %712 = vmatpush1.msra.mxu0 0.0
  %713 = vmatprep.subr.mxu0 0.0
  %714 = vmatpush1.msra.mxu0 0.0
  %715 = vmatprep.subr.mxu0 0.0
  %716 = vmatpush1.msra.mxu0 0.0
  %717 = vmatprep.subr.mxu0 0.0
  %718 = vmatpush1.msra.mxu0 0.0
  %719 = vmatprep.subr.mxu0 0.0
  %720 = vmatpush1.msra.mxu0 0.0
  %721 = vmatprep.subr.mxu0 0.0
  %722 = vmatpush1.msra.mxu0 0.0
  %723 = vmatprep.subr.mxu0 0.0
  %724 = vmatpush1.msra.mxu0 0.0
  %725 = vmatprep.subr.mxu0 0.0
  %726 = vmatpush1.msra.mxu0 0.0
  %727 = vmatprep.subr.mxu0 0.0
  %728 = vmatpush1.msra.mxu0 0.0
  %729 = vmatprep.subr.mxu0 0.0
  %730 = vmatpush1.msra.mxu0 0.0
  %731 = vmatprep.subr.mxu0 0.0
  %732 = vmatpush1.msra.mxu0 0.0
  %733 = vmatprep.subr.mxu0 0.0
  %734 = vmatpush1.msra.mxu0 0.0
  %735 = vmatprep.subr.mxu0 0.0
  %736 = vmatpush1.msra.mxu0 0.0
  %737 = vmatprep.subr.mxu0 0.0
  %738 = vmatpush1.msra.mxu0 0.0
  %739 = vmatprep.subr.mxu0 0.0
  %740 = vmatpush1.msra.mxu0 0.0
  %741 = vmatprep.subr.mxu0 0.0
  %742 = vmatpush1.msra.mxu0 0.0
  %743 = vmatprep.mubr.f32.mxu0 0.0
  %744 = vmatmul.mubr.f32.gmra.mrb[0].mxu0 %v599
  %v745 = vpop.f32.mrb[0].mxu0
  %v746 = vadd.f32 0.0, %v745
  %v747 = vpop.f32.mrb[0].mxu0
  %v748 = vadd.f32 0.0, %v747
  %749 = vdwg.mxu0
  %v750 = vadd.f32 %v604, %v675
  %v751 = vadd.f32 %v605, %v677
  %v752 = vadd.f32 %v606, %v746
  %v753 = vadd.f32 %v607, %v748
  %v754 = vxor.u32 %v750, 2147483648
  %v755 = vmul.f32 %v754, 1.442695
  %v756 = vpow.pop %v755
  %v757 = vadd.f32 %v756, 1.0
  %v758 = vrcp.pop %v757
  %v759 = vmul.f32 1.0, %v758
  %v760 = vxor.u32 %v751, 2147483648
  %v761 = vmul.f32 %v760, 1.442695
  %v762 = vpow.pop %v761
  %v763 = vadd.f32 %v762, 1.0
  %v764 = vrcp.pop %v763
  %v765 = vmul.f32 1.0, %v764
  %v766 = vtanh.pop %v752
  %v767 = vxor.u32 %v753, 2147483648
  %v768 = vmul.f32 %v767, 1.442695
  %v769 = vpow.pop %v768
  %v770 = vadd.f32 %v769, 1.0
  %v771 = vrcp.pop %v770
  %v772 = vmul.f32 1.0, %v771
  %v773 = vmul.f32 %v765, %v600
  %v774 = vmul.f32 %v759, %v766
  %v775 = vadd.f32 %v773, %v774
  %v776 = vtanh.pop %v775
  %v777 = vmul.f32 %v772, %v776
  %vm778 = vcmp.gt.s32.totalorder %v349, 1
  %v779 = vsel %vm778, 1, 0
  %780 = vset.pattern.permute.xlu0 0
  %781 = vperm.xlu0 %780, %v779
  %v782 = vpop.permute.xlu0 %781
  %vm783 = vcmp.eq.s32.totalorder %v782, 1
  %v784 = vsel %vm783, %v777, %v599
  %v785 = vsel %vm783, %v775, %v600
  %s786 = smul.u32 2, 4
  %s787 = smul.addr %s786, 8
  %s788 = scalar_lea.vmem [#allocation2], %s787
  %v789 = vld [vmem:[%s788] sm:$0xff]
  %v790 = vld [vmem:[%s788 + $0x8] sm:$0xff]
  %v791 = vld [vmem:[%s788 + $0x10] sm:$0xff]
  %v792 = vld [vmem:[%s788 + $0x18] sm:$0xff]
  %793 = vmatprep.subr.mxu0 %v351
  %794 = vmatpush1.msra.mxu0 %v350
  %795 = vmatprep.subr.mxu0 %v355
  %796 = vmatpush1.msra.mxu0 %v354
  %797 = vmatprep.subr.mxu0 %v359
  %798 = vmatpush1.msra.mxu0 %v358
  %799 = vmatprep.subr.mxu0 %v363
  %800 = vmatpush1.msra.mxu0 %v362
  %801 = vmatprep.subr.mxu0 %v367
  %802 = vmatpush1.msra.mxu0 %v366
  %803 = vmatprep.subr.mxu0 %v371
  %804 = vmatpush1.msra.mxu0 %v370
  %805 = vmatprep.subr.mxu0 %v375
  %806 = vmatpush1.msra.mxu0 %v374
  %807 = vmatprep.subr.mxu0 %v379
  %808 = vmatpush1.msra.mxu0 %v378
  %809 = vmatprep.subr.mxu0 %v383
  %810 = vmatpush1.msra.mxu0 %v382
  %811 = vmatprep.subr.mxu0 %v387
  %812 = vmatpush1.msra.mxu0 %v386
  %813 = vmatprep.subr.mxu0 %v391
  %814 = vmatpush1.msra.mxu0 %v390
  %815 = vmatprep.subr.mxu0 %v395
  %816 = vmatpush1.msra.mxu0 %v394
  %817 = vmatprep.subr.mxu0 %v399
  %818 = vmatpush1.msra.mxu0 %v398
  %819 = vmatprep.subr.mxu0 %v403
  %820 = vmatpush1.msra.mxu0 %v402
  %821 = vmatprep.subr.mxu0 %v407
  %822 = vmatpush1.msra.mxu0 %v406
  %823 = vmatprep.subr.mxu0 %v411
  %824 = vmatpush1.msra.mxu0 %v410
  %825 = vmatprep.subr.mxu0 0.0
  %826 = vmatpush1.msra.mxu0 0.0
  %827 = vmatprep.subr.mxu0 0.0
  %828 = vmatpush1.msra.mxu0 0.0
  %829 = vmatprep.subr.mxu0 0.0
  %830 = vmatpush1.msra.mxu0 0.0
  %831 = vmatprep.subr.mxu0 0.0
  %832 = vmatpush1.msra.mxu0 0.0
  %833 = vmatprep.subr.mxu0 0.0
  %834 = vmatpush1.msra.mxu0 0.0
  %835 = vmatprep.subr.mxu0 0.0
  %836 = vmatpush1.msra.mxu0 0.0
  %837 = vmatprep.subr.mxu0 0.0
  %838 = vmatpush1.msra.mxu0 0.0
  %839 = vmatprep.subr.mxu0 0.0
  %840 = vmatpush1.msra.mxu0 0.0
  %841 = vmatprep.subr.mxu0 0.0
  %842 = vmatpush1.msra.mxu0 0.0
  %843 = vmatprep.subr.mxu0 0.0
  %844 = vmatpush1.msra.mxu0 0.0
  %845 = vmatprep.subr.mxu0 0.0
  %846 = vmatpush1.msra.mxu0 0.0
  %847 = vmatprep.subr.mxu0 0.0
  %848 = vmatpush1.msra.mxu0 0.0
  %849 = vmatprep.subr.mxu0 0.0
  %850 = vmatpush1.msra.mxu0 0.0
  %851 = vmatprep.subr.mxu0 0.0
  %852 = vmatpush1.msra.mxu0 0.0
  %853 = vmatprep.subr.mxu0 0.0
  %854 = vmatpush1.msra.mxu0 0.0
  %855 = vmatprep.subr.mxu0 0.0
  %856 = vmatpush1.msra.mxu0 0.0
  %857 = vmatprep.mubr.f32.mxu0 0.0
  %858 = vmatmul.mubr.f32.gmra.mrb[0].mxu0 %v784
  %v859 = vpop.f32.mrb[0].mxu0
  %v860 = vadd.f32 0.0, %v859
  %v861 = vpop.f32.mrb[0].mxu0
  %v862 = vadd.f32 0.0, %v861
  %863 = vdwg.mxu0
  %864 = vmatprep.subr.mxu0 %v353
  %865 = vmatpush1.msra.mxu0 %v352
  %866 = vmatprep.subr.mxu0 %v357
  %867 = vmatpush1.msra.mxu0 %v356
  %868 = vmatprep.subr.mxu0 %v361
  %869 = vmatpush1.msra.mxu0 %v360
  %870 = vmatprep.subr.mxu0 %v365
  %871 = vmatpush1.msra.mxu0 %v364
  %872 = vmatprep.subr.mxu0 %v369
  %873 = vmatpush1.msra.mxu0 %v368
  %874 = vmatprep.subr.mxu0 %v373
  %875 = vmatpush1.msra.mxu0 %v372
  %876 = vmatprep.subr.mxu0 %v377
  %877 = vmatpush1.msra.mxu0 %v376
  %878 = vmatprep.subr.mxu0 %v381
  %879 = vmatpush1.msra.mxu0 %v380
  %880 = vmatprep.subr.mxu0 %v385
  %881 = vmatpush1.msra.mxu0 %v384
  %882 = vmatprep.subr.mxu0 %v389
  %883 = vmatpush1.msra.mxu0 %v388
  %884 = vmatprep.subr.mxu0 %v393
  %885 = vmatpush1.msra.mxu0 %v392
  %886 = vmatprep.subr.mxu0 %v397
  %887 = vmatpush1.msra.mxu0 %v396
  %888 = vmatprep.subr.mxu0 %v401
  %889 = vmatpush1.msra.mxu0 %v400
  %890 = vmatprep.subr.mxu0 %v405
  %891 = vmatpush1.msra.mxu0 %v404
  %892 = vmatprep.subr.mxu0 %v409
  %893 = vmatpush1.msra.mxu0 %v408
  %894 = vmatprep.subr.mxu0 %v413
  %895 = vmatpush1.msra.mxu0 %v412
  %896 = vmatprep.subr.mxu0 0.0
  %897 = vmatpush1.msra.mxu0 0.0
  %898 = vmatprep.subr.mxu0 0.0
  %899 = vmatpush1.msra.mxu0 0.0
  %900 = vmatprep.subr.mxu0 0.0
  %901 = vmatpush1.msra.mxu0 0.0
  %902 = vmatprep.subr.mxu0 0.0
  %903 = vmatpush1.msra.mxu0 0.0
  %904 = vmatprep.subr.mxu0 0.0
  %905 = vmatpush1.msra.mxu0 0.0
  %906 = vmatprep.subr.mxu0 0.0
  %907 = vmatpush1.msra.mxu0 0.0
  %908 = vmatprep.subr.mxu0 0.0
  %909 = vmatpush1.msra.mxu0 0.0
  %910 = vmatprep.subr.mxu0 0.0
  %911 = vmatpush1.msra.mxu0 0.0
  %912 = vmatprep.subr.mxu0 0.0
  %913 = vmatpush1.msra.mxu0 0.0
  %914 = vmatprep.subr.mxu0 0.0
  %915 = vmatpush1.msra.mxu0 0.0
  %916 = vmatprep.subr.mxu0 0.0
  %917 = vmatpush1.msra.mxu0 0.0
  %918 = vmatprep.subr.mxu0 0.0
  %919 = vmatpush1.msra.mxu0 0.0
  %920 = vmatprep.subr.mxu0 0.0
  %921 = vmatpush1.msra.mxu0 0.0
  %922 = vmatprep.subr.mxu0 0.0
  %923 = vmatpush1.msra.mxu0 0.0
  %924 = vmatprep.subr.mxu0 0.0
  %925 = vmatpush1.msra.mxu0 0.0
  %926 = vmatprep.subr.mxu0 0.0
  %927 = vmatpush1.msra.mxu0 0.0
  %928 = vmatprep.mubr.f32.mxu0 0.0
  %929 = vmatmul.mubr.f32.gmra.mrb[0].mxu0 %v784
  %v930 = vpop.f32.mrb[0].mxu0
  %v931 = vadd.f32 0.0, %v930
  %v932 = vpop.f32.mrb[0].mxu0
  %v933 = vadd.f32 0.0, %v932
  %934 = vdwg.mxu0
  %v935 = vadd.f32 %v789, %v860
  %v936 = vadd.f32 %v790, %v862
  %v937 = vadd.f32 %v791, %v931
  %v938 = vadd.f32 %v792, %v933
  %v939 = vxor.u32 %v935, 2147483648
  %v940 = vmul.f32 %v939, 1.442695
  %v941 = vpow.pop %v940
  %v942 = vadd.f32 %v941, 1.0
  %v943 = vrcp.pop %v942
  %v944 = vmul.f32 1.0, %v943
  %v945 = vxor.u32 %v936, 2147483648
  %v946 = vmul.f32 %v945, 1.442695
  %v947 = vpow.pop %v946
  %v948 = vadd.f32 %v947, 1.0
  %v949 = vrcp.pop %v948
  %v950 = vmul.f32 1.0, %v949
  %v951 = vtanh.pop %v937
  %v952 = vxor.u32 %v938, 2147483648
  %v953 = vmul.f32 %v952, 1.442695
  %v954 = vpow.pop %v953
  %v955 = vadd.f32 %v954, 1.0
  %v956 = vrcp.pop %v955
  %v957 = vmul.f32 1.0, %v956
  %v958 = vmul.f32 %v950, %v785
  %v959 = vmul.f32 %v944, %v951
  %v960 = vadd.f32 %v958, %v959
  %v961 = vtanh.pop %v960
  %v962 = vmul.f32 %v957, %v961
  %vm963 = vcmp.gt.s32.totalorder %v349, 2
  %v964 = vsel %vm963, 1, 0
  %965 = vset.pattern.permute.xlu0 0
  %966 = vperm.xlu0 %965, %v964
  %v967 = vpop.permute.xlu0 %966
  %vm968 = vcmp.eq.s32.totalorder %v967, 1
  %v969 = vsel %vm968, %v962, %v784
  %v970 = vsel %vm968, %v960, %v785
  %s971 = smul.u32 3, 4
  %s972 = smul.addr %s971, 8
  %s973 = scalar_lea.vmem [#allocation2], %s972
  %v974 = vld [vmem:[%s973] sm:$0xff]
  %v975 = vld [vmem:[%s973 + $0x8] sm:$0xff]
  %v976 = vld [vmem:[%s973 + $0x10] sm:$0xff]
  %v977 = vld [vmem:[%s973 + $0x18] sm:$0xff]
  %978 = vmatprep.subr.mxu0 %v351
  %979 = vmatpush1.msra.mxu0 %v350
  %980 = vmatprep.subr.mxu0 %v355
  %981 = vmatpush1.msra.mxu0 %v354
  %982 = vmatprep.subr.mxu0 %v359
  %983 = vmatpush1.msra.mxu0 %v358
  %984 = vmatprep.subr.mxu0 %v363
  %985 = vmatpush1.msra.mxu0 %v362
  %986 = vmatprep.subr.mxu0 %v367
  %987 = vmatpush1.msra.mxu0 %v366
  %988 = vmatprep.subr.mxu0 %v371
  %989 = vmatpush1.msra.mxu0 %v370
  %990 = vmatprep.subr.mxu0 %v375
  %991 = vmatpush1.msra.mxu0 %v374
  %992 = vmatprep.subr.mxu0 %v379
  %993 = vmatpush1.msra.mxu0 %v378
  %994 = vmatprep.subr.mxu0 %v383
  %995 = vmatpush1.msra.mxu0 %v382
  %996 = vmatprep.subr.mxu0 %v387
  %997 = vmatpush1.msra.mxu0 %v386
  %998 = vmatprep.subr.mxu0 %v391
  %999 = vmatpush1.msra.mxu0 %v390
  %1000 = vmatprep.subr.mxu0 %v395
  %1001 = vmatpush1.msra.mxu0 %v394
  %1002 = vmatprep.subr.mxu0 %v399
  %1003 = vmatpush1.msra.mxu0 %v398
  %1004 = vmatprep.subr.mxu0 %v403
  %1005 = vmatpush1.msra.mxu0 %v402
  %1006 = vmatprep.subr.mxu0 %v407
  %1007 = vmatpush1.msra.mxu0 %v406
  %1008 = vmatprep.subr.mxu0 %v411
  %1009 = vmatpush1.msra.mxu0 %v410
  %1010 = vmatprep.subr.mxu0 0.0
  %1011 = vmatpush1.msra.mxu0 0.0
  %1012 = vmatprep.subr.mxu0 0.0
  %1013 = vmatpush1.msra.mxu0 0.0
  %1014 = vmatprep.subr.mxu0 0.0
  %1015 = vmatpush1.msra.mxu0 0.0
  %1016 = vmatprep.subr.mxu0 0.0
  %1017 = vmatpush1.msra.mxu0 0.0
  %1018 = vmatprep.subr.mxu0 0.0
  %1019 = vmatpush1.msra.mxu0 0.0
  %1020 = vmatprep.subr.mxu0 0.0
  %1021 = vmatpush1.msra.mxu0 0.0
  %1022 = vmatprep.subr.mxu0 0.0
  %1023 = vmatpush1.msra.mxu0 0.0
  %1024 = vmatprep.subr.mxu0 0.0
  %1025 = vmatpush1.msra.mxu0 0.0
  %1026 = vmatprep.subr.mxu0 0.0
  %1027 = vmatpush1.msra.mxu0 0.0
  %1028 = vmatprep.subr.mxu0 0.0
  %1029 = vmatpush1.msra.mxu0 0.0
  %1030 = vmatprep.subr.mxu0 0.0
  %1031 = vmatpush1.msra.mxu0 0.0
  %1032 = vmatprep.subr.mxu0 0.0
  %1033 = vmatpush1.msra.mxu0 0.0
  %1034 = vmatprep.subr.mxu0 0.0
  %1035 = vmatpush1.msra.mxu0 0.0
  %1036 = vmatprep.subr.mxu0 0.0
  %1037 = vmatpush1.msra.mxu0 0.0
  %1038 = vmatprep.subr.mxu0 0.0
  %1039 = vmatpush1.msra.mxu0 0.0
  %1040 = vmatprep.subr.mxu0 0.0
  %1041 = vmatpush1.msra.mxu0 0.0
  %1042 = vmatprep.mubr.f32.mxu0 0.0
  %1043 = vmatmul.mubr.f32.gmra.mrb[0].mxu0 %v969
  %v1044 = vpop.f32.mrb[0].mxu0
  %v1045 = vadd.f32 0.0, %v1044
  %v1046 = vpop.f32.mrb[0].mxu0
  %v1047 = vadd.f32 0.0, %v1046
  %1048 = vdwg.mxu0
  %1049 = vmatprep.subr.mxu0 %v353
  %1050 = vmatpush1.msra.mxu0 %v352
  %1051 = vmatprep.subr.mxu0 %v357
  %1052 = vmatpush1.msra.mxu0 %v356
  %1053 = vmatprep.subr.mxu0 %v361
  %1054 = vmatpush1.msra.mxu0 %v360
  %1055 = vmatprep.subr.mxu0 %v365
  %1056 = vmatpush1.msra.mxu0 %v364
  %1057 = vmatprep.subr.mxu0 %v369
  %1058 = vmatpush1.msra.mxu0 %v368
  %1059 = vmatprep.subr.mxu0 %v373
  %1060 = vmatpush1.msra.mxu0 %v372
  %1061 = vmatprep.subr.mxu0 %v377
  %1062 = vmatpush1.msra.mxu0 %v376
  %1063 = vmatprep.subr.mxu0 %v381
  %1064 = vmatpush1.msra.mxu0 %v380
  %1065 = vmatprep.subr.mxu0 %v385
  %1066 = vmatpush1.msra.mxu0 %v384
  %1067 = vmatprep.subr.mxu0 %v389
  %1068 = vmatpush1.msra.mxu0 %v388
  %1069 = vmatprep.subr.mxu0 %v393
  %1070 = vmatpush1.msra.mxu0 %v392
  %1071 = vmatprep.subr.mxu0 %v397
  %1072 = vmatpush1.msra.mxu0 %v396
  %1073 = vmatprep.subr.mxu0 %v401
  %1074 = vmatpush1.msra.mxu0 %v400
  %1075 = vmatprep.subr.mxu0 %v405
  %1076 = vmatpush1.msra.mxu0 %v404
  %1077 = vmatprep.subr.mxu0 %v409
  %1078 = vmatpush1.msra.mxu0 %v408
  %1079 = vmatprep.subr.mxu0 %v413
  %1080 = vmatpush1.msra.mxu0 %v412
  %1081 = vmatprep.subr.mxu0 0.0
  %1082 = vmatpush1.msra.mxu0 0.0
  %1083 = vmatprep.subr.mxu0 0.0
  %1084 = vmatpush1.msra.mxu0 0.0
  %1085 = vmatprep.subr.mxu0 0.0
  %1086 = vmatpush1.msra.mxu0 0.0
  %1087 = vmatprep.subr.mxu0 0.0
  %1088 = vmatpush1.msra.mxu0 0.0
  %1089 = vmatprep.subr.mxu0 0.0
  %1090 = vmatpush1.msra.mxu0 0.0
  %1091 = vmatprep.subr.mxu0 0.0
  %1092 = vmatpush1.msra.mxu0 0.0
  %1093 = vmatprep.subr.mxu0 0.0
  %1094 = vmatpush1.msra.mxu0 0.0
  %1095 = vmatprep.subr.mxu0 0.0
  %1096 = vmatpush1.msra.mxu0 0.0
  %1097 = vmatprep.subr.mxu0 0.0
  %1098 = vmatpush1.msra.mxu0 0.0
  %1099 = vmatprep.subr.mxu0 0.0
  %1100 = vmatpush1.msra.mxu0 0.0
  %1101 = vmatprep.subr.mxu0 0.0
  %1102 = vmatpush1.msra.mxu0 0.0
  %1103 = vmatprep.subr.mxu0 0.0
  %1104 = vmatpush1.msra.mxu0 0.0
  %1105 = vmatprep.subr.mxu0 0.0
  %1106 = vmatpush1.msra.mxu0 0.0
  %1107 = vmatprep.subr.mxu0 0.0
  %1108 = vmatpush1.msra.mxu0 0.0
  %1109 = vmatprep.subr.mxu0 0.0
  %1110 = vmatpush1.msra.mxu0 0.0
  %1111 = vmatprep.subr.mxu0 0.0
  %1112 = vmatpush1.msra.mxu0 0.0
  %1113 = vmatprep.mubr.f32.mxu0 0.0
  %1114 = vmatmul.mubr.f32.gmra.mrb[0].mxu0 %v969
  %v1115 = vpop.f32.mrb[0].mxu0
  %v1116 = vadd.f32 0.0, %v1115
  %v1117 = vpop.f32.mrb[0].mxu0
  %v1118 = vadd.f32 0.0, %v1117
  %1119 = vdwg.mxu0
  %v1120 = vadd.f32 %v974, %v1045
  %v1121 = vadd.f32 %v975, %v1047
  %v1122 = vadd.f32 %v976, %v1116
  %v1123 = vadd.f32 %v977, %v1118
  %v1124 = vxor.u32 %v1120, 2147483648
  %v1125 = vmul.f32 %v1124, 1.442695
  %v1126 = vpow.pop %v1125
  %v1127 = vadd.f32 %v1126, 1.0
  %v1128 = vrcp.pop %v1127
  %v1129 = vmul.f32 1.0, %v1128
  %v1130 = vxor.u32 %v1121, 2147483648
  %v1131 = vmul.f32 %v1130, 1.442695
  %v1132 = vpow.pop %v1131
  %v1133 = vadd.f32 %v1132, 1.0
  %v1134 = vrcp.pop %v1133
  %v1135 = vmul.f32 1.0, %v1134
  %v1136 = vtanh.pop %v1122
  %v1137 = vxor.u32 %v1123, 2147483648
  %v1138 = vmul.f32 %v1137, 1.442695
  %v1139 = vpow.pop %v1138
  %v1140 = vadd.f32 %v1139, 1.0
  %v1141 = vrcp.pop %v1140
  %v1142 = vmul.f32 1.0, %v1141
  %v1143 = vmul.f32 %v1135, %v970
  %v1144 = vmul.f32 %v1129, %v1136
  %v1145 = vadd.f32 %v1143, %v1144
  %v1146 = vtanh.pop %v1145
  %v1147 = vmul.f32 %v1142, %v1146
  %vm1148 = vcmp.gt.s32.totalorder %v349, 3
  %v1149 = vsel %vm1148, 1, 0
  %1150 = vset.pattern.permute.xlu0 0
  %1151 = vperm.xlu0 %1150, %v1149
  %v1152 = vpop.permute.xlu0 %1151
  %vm1153 = vcmp.eq.s32.totalorder %v1152, 1
  %v1154 = vsel %vm1153, %v1147, %v969
  %v1155 = vsel %vm1153, %v1145, %v970
  %s1156 = smul.u32 4, 4
  %s1157 = smul.addr %s1156, 8
  %s1158 = scalar_lea.vmem [#allocation2], %s1157
  %v1159 = vld [vmem:[%s1158] sm:$0xff]
  %v1160 = vld [vmem:[%s1158 + $0x8] sm:$0xff]
  %v1161 = vld [vmem:[%s1158 + $0x10] sm:$0xff]
  %v1162 = vld [vmem:[%s1158 + $0x18] sm:$0xff]
  %1163 = vmatprep.subr.mxu0 %v351
  %1164 = vmatpush1.msra.mxu0 %v350
  %1165 = vmatprep.subr.mxu0 %v355
  %1166 = vmatpush1.msra.mxu0 %v354
  %1167 = vmatprep.subr.mxu0 %v359
  %1168 = vmatpush1.msra.mxu0 %v358
  %1169 = vmatprep.subr.mxu0 %v363
  %1170 = vmatpush1.msra.mxu0 %v362
  %1171 = vmatprep.subr.mxu0 %v367
  %1172 = vmatpush1.msra.mxu0 %v366
  %1173 = vmatprep.subr.mxu0 %v371
  %1174 = vmatpush1.msra.mxu0 %v370
  %1175 = vmatprep.subr.mxu0 %v375
  %1176 = vmatpush1.msra.mxu0 %v374
  %1177 = vmatprep.subr.mxu0 %v379
  %1178 = vmatpush1.msra.mxu0 %v378
  %1179 = vmatprep.subr.mxu0 %v383
  %1180 = vmatpush1.msra.mxu0 %v382
  %1181 = vmatprep.subr.mxu0 %v387
  %1182 = vmatpush1.msra.mxu0 %v386
  %1183 = vmatprep.subr.mxu0 %v391
  %1184 = vmatpush1.msra.mxu0 %v390
  %1185 = vmatprep.subr.mxu0 %v395
  %1186 = vmatpush1.msra.mxu0 %v394
  %1187 = vmatprep.subr.mxu0 %v399
  %1188 = vmatpush1.msra.mxu0 %v398
  %1189 = vmatprep.subr.mxu0 %v403
  %1190 = vmatpush1.msra.mxu0 %v402
  %1191 = vmatprep.subr.mxu0 %v407
  %1192 = vmatpush1.msra.mxu0 %v406
  %1193 = vmatprep.subr.mxu0 %v411
  %1194 = vmatpush1.msra.mxu0 %v410
  %1195 = vmatprep.subr.mxu0 0.0
  %1196 = vmatpush1.msra.mxu0 0.0
  %1197 = vmatprep.subr.mxu0 0.0
  %1198 = vmatpush1.msra.mxu0 0.0
  %1199 = vmatprep.subr.mxu0 0.0
  %1200 = vmatpush1.msra.mxu0 0.0
  %1201 = vmatprep.subr.mxu0 0.0
  %1202 = vmatpush1.msra.mxu0 0.0
  %1203 = vmatprep.subr.mxu0 0.0
  %1204 = vmatpush1.msra.mxu0 0.0
  %1205 = vmatprep.subr.mxu0 0.0
  %1206 = vmatpush1.msra.mxu0 0.0
  %1207 = vmatprep.subr.mxu0 0.0
  %1208 = vmatpush1.msra.mxu0 0.0
  %1209 = vmatprep.subr.mxu0 0.0
  %1210 = vmatpush1.msra.mxu0 0.0
  %1211 = vmatprep.subr.mxu0 0.0
  %1212 = vmatpush1.msra.mxu0 0.0
  %1213 = vmatprep.subr.mxu0 0.0
  %1214 = vmatpush1.msra.mxu0 0.0
  %1215 = vmatprep.subr.mxu0 0.0
  %1216 = vmatpush1.msra.mxu0 0.0
  %1217 = vmatprep.subr.mxu0 0.0
  %1218 = vmatpush1.msra.mxu0 0.0
  %1219 = vmatprep.subr.mxu0 0.0
  %1220 = vmatpush1.msra.mxu0 0.0
  %1221 = vmatprep.subr.mxu0 0.0
  %1222 = vmatpush1.msra.mxu0 0.0
  %1223 = vmatprep.subr.mxu0 0.0
  %1224 = vmatpush1.msra.mxu0 0.0
  %1225 = vmatprep.subr.mxu0 0.0
  %1226 = vmatpush1.msra.mxu0 0.0
  %1227 = vmatprep.mubr.f32.mxu0 0.0
  %1228 = vmatmul.mubr.f32.gmra.mrb[0].mxu0 %v1154
  %v1229 = vpop.f32.mrb[0].mxu0
  %v1230 = vadd.f32 0.0, %v1229
  %v1231 = vpop.f32.mrb[0].mxu0
  %v1232 = vadd.f32 0.0, %v1231
  %1233 = vdwg.mxu0
  %1234 = vmatprep.subr.mxu0 %v353
  %1235 = vmatpush1.msra.mxu0 %v352
  %1236 = vmatprep.subr.mxu0 %v357
  %1237 = vmatpush1.msra.mxu0 %v356
  %1238 = vmatprep.subr.mxu0 %v361
  %1239 = vmatpush1.msra.mxu0 %v360
  %1240 = vmatprep.subr.mxu0 %v365
  %1241 = vmatpush1.msra.mxu0 %v364
  %1242 = vmatprep.subr.mxu0 %v369
  %1243 = vmatpush1.msra.mxu0 %v368
  %1244 = vmatprep.subr.mxu0 %v373
  %1245 = vmatpush1.msra.mxu0 %v372
  %1246 = vmatprep.subr.mxu0 %v377
  %1247 = vmatpush1.msra.mxu0 %v376
  %1248 = vmatprep.subr.mxu0 %v381
  %1249 = vmatpush1.msra.mxu0 %v380
  %1250 = vmatprep.subr.mxu0 %v385
  %1251 = vmatpush1.msra.mxu0 %v384
  %1252 = vmatprep.subr.mxu0 %v389
  %1253 = vmatpush1.msra.mxu0 %v388
  %1254 = vmatprep.subr.mxu0 %v393
  %1255 = vmatpush1.msra.mxu0 %v392
  %1256 = vmatprep.subr.mxu0 %v397
  %1257 = vmatpush1.msra.mxu0 %v396
  %1258 = vmatprep.subr.mxu0 %v401
  %1259 = vmatpush1.msra.mxu0 %v400
  %1260 = vmatprep.subr.mxu0 %v405
  %1261 = vmatpush1.msra.mxu0 %v404
  %1262 = vmatprep.subr.mxu0 %v409
  %1263 = vmatpush1.msra.mxu0 %v408
  %1264 = vmatprep.subr.mxu0 %v413
  %1265 = vmatpush1.msra.mxu0 %v412
  %1266 = vmatprep.subr.mxu0 0.0
  %1267 = vmatpush1.msra.mxu0 0.0
  %1268 = vmatprep.subr.mxu0 0.0
  %1269 = vmatpush1.msra.mxu0 0.0
  %1270 = vmatprep.subr.mxu0 0.0
  %1271 = vmatpush1.msra.mxu0 0.0
  %1272 = vmatprep.subr.mxu0 0.0
  %1273 = vmatpush1.msra.mxu0 0.0
  %1274 = vmatprep.subr.mxu0 0.0
  %1275 = vmatpush1.msra.mxu0 0.0
  %1276 = vmatprep.subr.mxu0 0.0
  %1277 = vmatpush1.msra.mxu0 0.0
  %1278 = vmatprep.subr.mxu0 0.0
  %1279 = vmatpush1.msra.mxu0 0.0
  %1280 = vmatprep.subr.mxu0 0.0
  %1281 = vmatpush1.msra.mxu0 0.0
  %1282 = vmatprep.subr.mxu0 0.0
  %1283 = vmatpush1.msra.mxu0 0.0
  %1284 = vmatprep.subr.mxu0 0.0
  %1285 = vmatpush1.msra.mxu0 0.0
  %1286 = vmatprep.subr.mxu0 0.0
  %1287 = vmatpush1.msra.mxu0 0.0
  %1288 = vmatprep.subr.mxu0 0.0
  %1289 = vmatpush1.msra.mxu0 0.0
  %1290 = vmatprep.subr.mxu0 0.0
  %1291 = vmatpush1.msra.mxu0 0.0
  %1292 = vmatprep.subr.mxu0 0.0
  %1293 = vmatpush1.msra.mxu0 0.0
  %1294 = vmatprep.subr.mxu0 0.0
  %1295 = vmatpush1.msra.mxu0 0.0
  %1296 = vmatprep.subr.mxu0 0.0
  %1297 = vmatpush1.msra.mxu0 0.0
  %1298 = vmatprep.mubr.f32.mxu0 0.0
  %1299 = vmatmul.mubr.f32.gmra.mrb[0].mxu0 %v1154
  %v1300 = vpop.f32.mrb[0].mxu0
  %v1301 = vadd.f32 0.0, %v1300
  %v1302 = vpop.f32.mrb[0].mxu0
  %v1303 = vadd.f32 0.0, %v1302
  %1304 = vdwg.mxu0
  %v1305 = vadd.f32 %v1159, %v1230
  %v1306 = vadd.f32 %v1160, %v1232
  %v1307 = vadd.f32 %v1161, %v1301
  %v1308 = vadd.f32 %v1162, %v1303
  %v1309 = vxor.u32 %v1305, 2147483648
  %v1310 = vmul.f32 %v1309, 1.442695
  %v1311 = vpow.pop %v1310
  %v1312 = vadd.f32 %v1311, 1.0
  %v1313 = vrcp.pop %v1312
  %v1314 = vmul.f32 1.0, %v1313
  %v1315 = vxor.u32 %v1306, 2147483648
  %v1316 = vmul.f32 %v1315, 1.442695
  %v1317 = vpow.pop %v1316
  %v1318 = vadd.f32 %v1317, 1.0
  %v1319 = vrcp.pop %v1318
  %v1320 = vmul.f32 1.0, %v1319
  %v1321 = vtanh.pop %v1307
  %v1322 = vxor.u32 %v1308, 2147483648
  %v1323 = vmul.f32 %v1322, 1.442695
  %v1324 = vpow.pop %v1323
  %v1325 = vadd.f32 %v1324, 1.0
  %v1326 = vrcp.pop %v1325
  %v1327 = vmul.f32 1.0, %v1326
  %v1328 = vmul.f32 %v1320, %v1155
  %v1329 = vmul.f32 %v1314, %v1321
  %v1330 = vadd.f32 %v1328, %v1329
  %v1331 = vtanh.pop %v1330
  %v1332 = vmul.f32 %v1327, %v1331
  %vm1333 = vcmp.gt.s32.totalorder %v349, 4
  %v1334 = vsel %vm1333, 1, 0
  %1335 = vset.pattern.permute.xlu0 0
  %1336 = vperm.xlu0 %1335, %v1334
  %v1337 = vpop.permute.xlu0 %1336
  %vm1338 = vcmp.eq.s32.totalorder %v1337, 1
  %v1339 = vsel %vm1338, %v1332, %v1154
  %v1340 = vsel %vm1338, %v1330, %v1155
  %s1341 = smul.u32 5, 4
  %s1342 = smul.addr %s1341, 8
  %s1343 = scalar_lea.vmem [#allocation2], %s1342
  %v1344 = vld [vmem:[%s1343] sm:$0xff]
  %v1345 = vld [vmem:[%s1343 + $0x8] sm:$0xff]
  %v1346 = vld [vmem:[%s1343 + $0x10] sm:$0xff]
  %v1347 = vld [vmem:[%s1343 + $0x18] sm:$0xff]
  %1348 = vmatprep.subr.mxu0 %v351
  %1349 = vmatpush1.msra.mxu0 %v350
  %1350 = vmatprep.subr.mxu0 %v355
  %1351 = vmatpush1.msra.mxu0 %v354
  %1352 = vmatprep.subr.mxu0 %v359
  %1353 = vmatpush1.msra.mxu0 %v358
  %1354 = vmatprep.subr.mxu0 %v363
  %1355 = vmatpush1.msra.mxu0 %v362
  %1356 = vmatprep.subr.mxu0 %v367
  %1357 = vmatpush1.msra.mxu0 %v366
  %1358 = vmatprep.subr.mxu0 %v371
  %1359 = vmatpush1.msra.mxu0 %v370
  %1360 = vmatprep.subr.mxu0 %v375
  %1361 = vmatpush1.msra.mxu0 %v374
  %1362 = vmatprep.subr.mxu0 %v379
  %1363 = vmatpush1.msra.mxu0 %v378
  %1364 = vmatprep.subr.mxu0 %v383
  %1365 = vmatpush1.msra.mxu0 %v382
  %1366 = vmatprep.subr.mxu0 %v387
  %1367 = vmatpush1.msra.mxu0 %v386
  %1368 = vmatprep.subr.mxu0 %v391
  %1369 = vmatpush1.msra.mxu0 %v390
  %1370 = vmatprep.subr.mxu0 %v395
  %1371 = vmatpush1.msra.mxu0 %v394
  %1372 = vmatprep.subr.mxu0 %v399
  %1373 = vmatpush1.msra.mxu0 %v398
  %1374 = vmatprep.subr.mxu0 %v403
  %1375 = vmatpush1.msra.mxu0 %v402
  %1376 = vmatprep.subr.mxu0 %v407
  %1377 = vmatpush1.msra.mxu0 %v406
  %1378 = vmatprep.subr.mxu0 %v411
  %1379 = vmatpush1.msra.mxu0 %v410
  %1380 = vmatprep.subr.mxu0 0.0
  %1381 = vmatpush1.msra.mxu0 0.0
  %1382 = vmatprep.subr.mxu0 0.0
  %1383 = vmatpush1.msra.mxu0 0.0
  %1384 = vmatprep.subr.mxu0 0.0
  %1385 = vmatpush1.msra.mxu0 0.0
  %1386 = vmatprep.subr.mxu0 0.0
  %1387 = vmatpush1.msra.mxu0 0.0
  %1388 = vmatprep.subr.mxu0 0.0
  %1389 = vmatpush1.msra.mxu0 0.0
  %1390 = vmatprep.subr.mxu0 0.0
  %1391 = vmatpush1.msra.mxu0 0.0
  %1392 = vmatprep.subr.mxu0 0.0
  %1393 = vmatpush1.msra.mxu0 0.0
  %1394 = vmatprep.subr.mxu0 0.0
  %1395 = vmatpush1.msra.mxu0 0.0
  %1396 = vmatprep.subr.mxu0 0.0
  %1397 = vmatpush1.msra.mxu0 0.0
  %1398 = vmatprep.subr.mxu0 0.0
  %1399 = vmatpush1.msra.mxu0 0.0
  %1400 = vmatprep.subr.mxu0 0.0
  %1401 = vmatpush1.msra.mxu0 0.0
  %1402 = vmatprep.subr.mxu0 0.0
  %1403 = vmatpush1.msra.mxu0 0.0
  %1404 = vmatprep.subr.mxu0 0.0
  %1405 = vmatpush1.msra.mxu0 0.0
  %1406 = vmatprep.subr.mxu0 0.0
  %1407 = vmatpush1.msra.mxu0 0.0
  %1408 = vmatprep.subr.mxu0 0.0
  %1409 = vmatpush1.msra.mxu0 0.0
  %1410 = vmatprep.subr.mxu0 0.0
  %1411 = vmatpush1.msra.mxu0 0.0
  %1412 = vmatprep.mubr.f32.mxu0 0.0
  %1413 = vmatmul.mubr.f32.gmra.mrb[0].mxu0 %v1339
  %v1414 = vpop.f32.mrb[0].mxu0
  %v1415 = vadd.f32 0.0, %v1414
  %v1416 = vpop.f32.mrb[0].mxu0
  %v1417 = vadd.f32 0.0, %v1416
  %1418 = vdwg.mxu0
  %1419 = vmatprep.subr.mxu0 %v353
  %1420 = vmatpush1.msra.mxu0 %v352
  %1421 = vmatprep.subr.mxu0 %v357
  %1422 = vmatpush1.msra.mxu0 %v356
  %1423 = vmatprep.subr.mxu0 %v361
  %1424 = vmatpush1.msra.mxu0 %v360
  %1425 = vmatprep.subr.mxu0 %v365
  %1426 = vmatpush1.msra.mxu0 %v364
  %1427 = vmatprep.subr.mxu0 %v369
  %1428 = vmatpush1.msra.mxu0 %v368
  %1429 = vmatprep.subr.mxu0 %v373
  %1430 = vmatpush1.msra.mxu0 %v372
  %1431 = vmatprep.subr.mxu0 %v377
  %1432 = vmatpush1.msra.mxu0 %v376
  %1433 = vmatprep.subr.mxu0 %v381
  %1434 = vmatpush1.msra.mxu0 %v380
  %1435 = vmatprep.subr.mxu0 %v385
  %1436 = vmatpush1.msra.mxu0 %v384
  %1437 = vmatprep.subr.mxu0 %v389
  %1438 = vmatpush1.msra.mxu0 %v388
  %1439 = vmatprep.subr.mxu0 %v393
  %1440 = vmatpush1.msra.mxu0 %v392
  %1441 = vmatprep.subr.mxu0 %v397
  %1442 = vmatpush1.msra.mxu0 %v396
  %1443 = vmatprep.subr.mxu0 %v401
  %1444 = vmatpush1.msra.mxu0 %v400
  %1445 = vmatprep.subr.mxu0 %v405
  %1446 = vmatpush1.msra.mxu0 %v404
  %1447 = vmatprep.subr.mxu0 %v409
  %1448 = vmatpush1.msra.mxu0 %v408
  %1449 = vmatprep.subr.mxu0 %v413
  %1450 = vmatpush1.msra.mxu0 %v412
  %1451 = vmatprep.subr.mxu0 0.0
  %1452 = vmatpush1.msra.mxu0 0.0
  %1453 = vmatprep.subr.mxu0 0.0
  %1454 = vmatpush1.msra.mxu0 0.0
  %1455 = vmatprep.subr.mxu0 0.0
  %1456 = vmatpush1.msra.mxu0 0.0
  %1457 = vmatprep.subr.mxu0 0.0
  %1458 = vmatpush1.msra.mxu0 0.0
  %1459 = vmatprep.subr.mxu0 0.0
  %1460 = vmatpush1.msra.mxu0 0.0
  %1461 = vmatprep.subr.mxu0 0.0
  %1462 = vmatpush1.msra.mxu0 0.0
  %1463 = vmatprep.subr.mxu0 0.0
  %1464 = vmatpush1.msra.mxu0 0.0
  %1465 = vmatprep.subr.mxu0 0.0
  %1466 = vmatpush1.msra.mxu0 0.0
  %1467 = vmatprep.subr.mxu0 0.0
  %1468 = vmatpush1.msra.mxu0 0.0
  %1469 = vmatprep.subr.mxu0 0.0
  %1470 = vmatpush1.msra.mxu0 0.0
  %1471 = vmatprep.subr.mxu0 0.0
  %1472 = vmatpush1.msra.mxu0 0.0
  %1473 = vmatprep.subr.mxu0 0.0
  %1474 = vmatpush1.msra.mxu0 0.0
  %1475 = vmatprep.subr.mxu0 0.0
  %1476 = vmatpush1.msra.mxu0 0.0
  %1477 = vmatprep.subr.mxu0 0.0
  %1478 = vmatpush1.msra.mxu0 0.0
  %1479 = vmatprep.subr.mxu0 0.0
  %1480 = vmatpush1.msra.mxu0 0.0
  %1481 = vmatprep.subr.mxu0 0.0
  %1482 = vmatpush1.msra.mxu0 0.0
  %1483 = vmatprep.mubr.f32.mxu0 0.0
  %1484 = vmatmul.mubr.f32.gmra.mrb[0].mxu0 %v1339
  %v1485 = vpop.f32.mrb[0].mxu0
  %v1486 = vadd.f32 0.0, %v1485
  %v1487 = vpop.f32.mrb[0].mxu0
  %v1488 = vadd.f32 0.0, %v1487
  %1489 = vdwg.mxu0
  %v1490 = vadd.f32 %v1344, %v1415
  %v1491 = vadd.f32 %v1345, %v1417
  %v1492 = vadd.f32 %v1346, %v1486
  %v1493 = vadd.f32 %v1347, %v1488
  %v1494 = vxor.u32 %v1490, 2147483648
  %v1495 = vmul.f32 %v1494, 1.442695
  %v1496 = vpow.pop %v1495
  %v1497 = vadd.f32 %v1496, 1.0
  %v1498 = vrcp.pop %v1497
  %v1499 = vmul.f32 1.0, %v1498
  %v1500 = vxor.u32 %v1491, 2147483648
  %v1501 = vmul.f32 %v1500, 1.442695
  %v1502 = vpow.pop %v1501
  %v1503 = vadd.f32 %v1502, 1.0
  %v1504 = vrcp.pop %v1503
  %v1505 = vmul.f32 1.0, %v1504
  %v1506 = vtanh.pop %v1492
  %v1507 = vxor.u32 %v1493, 2147483648
  %v1508 = vmul.f32 %v1507, 1.442695
  %v1509 = vpow.pop %v1508
  %v1510 = vadd.f32 %v1509, 1.0
  %v1511 = vrcp.pop %v1510
  %v1512 = vmul.f32 1.0, %v1511
  %v1513 = vmul.f32 %v1505, %v1340
  %v1514 = vmul.f32 %v1499, %v1506
  %v1515 = vadd.f32 %v1513, %v1514
  %v1516 = vtanh.pop %v1515
  %v1517 = vmul.f32 %v1512, %v1516
  %vm1518 = vcmp.gt.s32.totalorder %v349, 5
  %v1519 = vsel %vm1518, 1, 0
  %1520 = vset.pattern.permute.xlu0 0
  %1521 = vperm.xlu0 %1520, %v1519
  %v1522 = vpop.permute.xlu0 %1521
  %vm1523 = vcmp.eq.s32.totalorder %v1522, 1
  %v1524 = vsel %vm1523, %v1517, %v1339
  %v1525 = vsel %vm1523, %v1515, %v1340
  %s1526 = smul.u32 6, 4
  %s1527 = smul.addr %s1526, 8
  %s1528 = scalar_lea.vmem [#allocation2], %s1527
  %v1529 = vld [vmem:[%s1528] sm:$0xff]
  %v1530 = vld [vmem:[%s1528 + $0x8] sm:$0xff]
  %v1531 = vld [vmem:[%s1528 + $0x10] sm:$0xff]
  %v1532 = vld [vmem:[%s1528 + $0x18] sm:$0xff]
  %1533 = vmatprep.subr.mxu0 %v351
  %1534 = vmatpush1.msra.mxu0 %v350
  %1535 = vmatprep.subr.mxu0 %v355
  %1536 = vmatpush1.msra.mxu0 %v354
  %1537 = vmatprep.subr.mxu0 %v359
  %1538 = vmatpush1.msra.mxu0 %v358
  %1539 = vmatprep.subr.mxu0 %v363
  %1540 = vmatpush1.msra.mxu0 %v362
  %1541 = vmatprep.subr.mxu0 %v367
  %1542 = vmatpush1.msra.mxu0 %v366
  %1543 = vmatprep.subr.mxu0 %v371
  %1544 = vmatpush1.msra.mxu0 %v370
  %1545 = vmatprep.subr.mxu0 %v375
  %1546 = vmatpush1.msra.mxu0 %v374
  %1547 = vmatprep.subr.mxu0 %v379
  %1548 = vmatpush1.msra.mxu0 %v378
  %1549 = vmatprep.subr.mxu0 %v383
  %1550 = vmatpush1.msra.mxu0 %v382
  %1551 = vmatprep.subr.mxu0 %v387
  %1552 = vmatpush1.msra.mxu0 %v386
  %1553 = vmatprep.subr.mxu0 %v391
  %1554 = vmatpush1.msra.mxu0 %v390
  %1555 = vmatprep.subr.mxu0 %v395
  %1556 = vmatpush1.msra.mxu0 %v394
  %1557 = vmatprep.subr.mxu0 %v399
  %1558 = vmatpush1.msra.mxu0 %v398
  %1559 = vmatprep.subr.mxu0 %v403
  %1560 = vmatpush1.msra.mxu0 %v402
  %1561 = vmatprep.subr.mxu0 %v407
  %1562 = vmatpush1.msra.mxu0 %v406
  %1563 = vmatprep.subr.mxu0 %v411
  %1564 = vmatpush1.msra.mxu0 %v410
  %1565 = vmatprep.subr.mxu0 0.0
  %1566 = vmatpush1.msra.mxu0 0.0
  %1567 = vmatprep.subr.mxu0 0.0
  %1568 = vmatpush1.msra.mxu0 0.0
  %1569 = vmatprep.subr.mxu0 0.0
  %1570 = vmatpush1.msra.mxu0 0.0
  %1571 = vmatprep.subr.mxu0 0.0
  %1572 = vmatpush1.msra.mxu0 0.0
  %1573 = vmatprep.subr.mxu0 0.0
  %1574 = vmatpush1.msra.mxu0 0.0
  %1575 = vmatprep.subr.mxu0 0.0
  %1576 = vmatpush1.msra.mxu0 0.0
  %1577 = vmatprep.subr.mxu0 0.0
  %1578 = vmatpush1.msra.mxu0 0.0
  %1579 = vmatprep.subr.mxu0 0.0
  %1580 = vmatpush1.msra.mxu0 0.0
  %1581 = vmatprep.subr.mxu0 0.0
  %1582 = vmatpush1.msra.mxu0 0.0
  %1583 = vmatprep.subr.mxu0 0.0
  %1584 = vmatpush1.msra.mxu0 0.0
  %1585 = vmatprep.subr.mxu0 0.0
  %1586 = vmatpush1.msra.mxu0 0.0
  %1587 = vmatprep.subr.mxu0 0.0
  %1588 = vmatpush1.msra.mxu0 0.0
  %1589 = vmatprep.subr.mxu0 0.0
  %1590 = vmatpush1.msra.mxu0 0.0
  %1591 = vmatprep.subr.mxu0 0.0
  %1592 = vmatpush1.msra.mxu0 0.0
  %1593 = vmatprep.subr.mxu0 0.0
  %1594 = vmatpush1.msra.mxu0 0.0
  %1595 = vmatprep.subr.mxu0 0.0
  %1596 = vmatpush1.msra.mxu0 0.0
  %1597 = vmatprep.mubr.f32.mxu0 0.0
  %1598 = vmatmul.mubr.f32.gmra.mrb[0].mxu0 %v1524
  %v1599 = vpop.f32.mrb[0].mxu0
  %v1600 = vadd.f32 0.0, %v1599
  %v1601 = vpop.f32.mrb[0].mxu0
  %v1602 = vadd.f32 0.0, %v1601
  %1603 = vdwg.mxu0
  %1604 = vmatprep.subr.mxu0 %v353
  %1605 = vmatpush1.msra.mxu0 %v352
  %1606 = vmatprep.subr.mxu0 %v357
  %1607 = vmatpush1.msra.mxu0 %v356
  %1608 = vmatprep.subr.mxu0 %v361
  %1609 = vmatpush1.msra.mxu0 %v360
  %1610 = vmatprep.subr.mxu0 %v365
  %1611 = vmatpush1.msra.mxu0 %v364
  %1612 = vmatprep.subr.mxu0 %v369
  %1613 = vmatpush1.msra.mxu0 %v368
  %1614 = vmatprep.subr.mxu0 %v373
  %1615 = vmatpush1.msra.mxu0 %v372
  %1616 = vmatprep.subr.mxu0 %v377
  %1617 = vmatpush1.msra.mxu0 %v376
  %1618 = vmatprep.subr.mxu0 %v381
  %1619 = vmatpush1.msra.mxu0 %v380
  %1620 = vmatprep.subr.mxu0 %v385
  %1621 = vmatpush1.msra.mxu0 %v384
  %1622 = vmatprep.subr.mxu0 %v389
  %1623 = vmatpush1.msra.mxu0 %v388
  %1624 = vmatprep.subr.mxu0 %v393
  %1625 = vmatpush1.msra.mxu0 %v392
  %1626 = vmatprep.subr.mxu0 %v397
  %1627 = vmatpush1.msra.mxu0 %v396
  %1628 = vmatprep.subr.mxu0 %v401
  %1629 = vmatpush1.msra.mxu0 %v400
  %1630 = vmatprep.subr.mxu0 %v405
  %1631 = vmatpush1.msra.mxu0 %v404
  %1632 = vmatprep.subr.mxu0 %v409
  %1633 = vmatpush1.msra.mxu0 %v408
  %1634 = vmatprep.subr.mxu0 %v413
  %1635 = vmatpush1.msra.mxu0 %v412
  %1636 = vmatprep.subr.mxu0 0.0
  %1637 = vmatpush1.msra.mxu0 0.0
  %1638 = vmatprep.subr.mxu0 0.0
  %1639 = vmatpush1.msra.mxu0 0.0
  %1640 = vmatprep.subr.mxu0 0.0
  %1641 = vmatpush1.msra.mxu0 0.0
  %1642 = vmatprep.subr.mxu0 0.0
  %1643 = vmatpush1.msra.mxu0 0.0
  %1644 = vmatprep.subr.mxu0 0.0
  %1645 = vmatpush1.msra.mxu0 0.0
  %1646 = vmatprep.subr.mxu0 0.0
  %1647 = vmatpush1.msra.mxu0 0.0
  %1648 = vmatprep.subr.mxu0 0.0
  %1649 = vmatpush1.msra.mxu0 0.0
  %1650 = vmatprep.subr.mxu0 0.0
  %1651 = vmatpush1.msra.mxu0 0.0
  %1652 = vmatprep.subr.mxu0 0.0
  %1653 = vmatpush1.msra.mxu0 0.0
  %1654 = vmatprep.subr.mxu0 0.0
  %1655 = vmatpush1.msra.mxu0 0.0
  %1656 = vmatprep.subr.mxu0 0.0
  %1657 = vmatpush1.msra.mxu0 0.0
  %1658 = vmatprep.subr.mxu0 0.0
  %1659 = vmatpush1.msra.mxu0 0.0
  %1660 = vmatprep.subr.mxu0 0.0
  %1661 = vmatpush1.msra.mxu0 0.0
  %1662 = vmatprep.subr.mxu0 0.0
  %1663 = vmatpush1.msra.mxu0 0.0
  %1664 = vmatprep.subr.mxu0 0.0
  %1665 = vmatpush1.msra.mxu0 0.0
  %1666 = vmatprep.subr.mxu0 0.0
  %1667 = vmatpush1.msra.mxu0 0.0
  %1668 = vmatprep.mubr.f32.mxu0 0.0
  %1669 = vmatmul.mubr.f32.gmra.mrb[0].mxu0 %v1524
  %v1670 = vpop.f32.mrb[0].mxu0
  %v1671 = vadd.f32 0.0, %v1670
  %v1672 = vpop.f32.mrb[0].mxu0
  %v1673 = vadd.f32 0.0, %v1672
  %1674 = vdwg.mxu0
  %v1675 = vadd.f32 %v1529, %v1600
  %v1676 = vadd.f32 %v1530, %v1602
  %v1677 = vadd.f32 %v1531, %v1671
  %v1678 = vadd.f32 %v1532, %v1673
  %v1679 = vxor.u32 %v1675, 2147483648
  %v1680 = vmul.f32 %v1679, 1.442695
  %v1681 = vpow.pop %v1680
  %v1682 = vadd.f32 %v1681, 1.0
  %v1683 = vrcp.pop %v1682
  %v1684 = vmul.f32 1.0, %v1683
  %v1685 = vxor.u32 %v1676, 2147483648
  %v1686 = vmul.f32 %v1685, 1.442695
  %v1687 = vpow.pop %v1686
  %v1688 = vadd.f32 %v1687, 1.0
  %v1689 = vrcp.pop %v1688
  %v1690 = vmul.f32 1.0, %v1689
  %v1691 = vtanh.pop %v1677
  %v1692 = vxor.u32 %v1678, 2147483648
  %v1693 = vmul.f32 %v1692, 1.442695
  %v1694 = vpow.pop %v1693
  %v1695 = vadd.f32 %v1694, 1.0
  %v1696 = vrcp.pop %v1695
  %v1697 = vmul.f32 1.0, %v1696
  %v1698 = vmul.f32 %v1690, %v1525
  %v1699 = vmul.f32 %v1684, %v1691
  %v1700 = vadd.f32 %v1698, %v1699
  %v1701 = vtanh.pop %v1700
  %v1702 = vmul.f32 %v1697, %v1701
  %vm1703 = vcmp.gt.s32.totalorder %v349, 6
  %v1704 = vsel %vm1703, 1, 0
  %1705 = vset.pattern.permute.xlu0 0
  %1706 = vperm.xlu0 %1705, %v1704
  %v1707 = vpop.permute.xlu0 %1706
  %vm1708 = vcmp.eq.s32.totalorder %v1707, 1
  %v1709 = vsel %vm1708, %v1702, %v1524
  %v1710 = vsel %vm1708, %v1700, %v1525
  %s1711 = smul.u32 7, 4
  %s1712 = smul.addr %s1711, 8
  %s1713 = scalar_lea.vmem [#allocation2], %s1712
  %v1714 = vld [vmem:[%s1713] sm:$0xff]
  %v1715 = vld [vmem:[%s1713 + $0x8] sm:$0xff]
  %v1716 = vld [vmem:[%s1713 + $0x10] sm:$0xff]
  %v1717 = vld [vmem:[%s1713 + $0x18] sm:$0xff]
  %1718 = vmatprep.subr.mxu0 %v351
  %1719 = vmatpush1.msra.mxu0 %v350
  %1720 = vmatprep.subr.mxu0 %v355
  %1721 = vmatpush1.msra.mxu0 %v354
  %1722 = vmatprep.subr.mxu0 %v359
  %1723 = vmatpush1.msra.mxu0 %v358
  %1724 = vmatprep.subr.mxu0 %v363
  %1725 = vmatpush1.msra.mxu0 %v362
  %1726 = vmatprep.subr.mxu0 %v367
  %1727 = vmatpush1.msra.mxu0 %v366
  %1728 = vmatprep.subr.mxu0 %v371
  %1729 = vmatpush1.msra.mxu0 %v370
  %1730 = vmatprep.subr.mxu0 %v375
  %1731 = vmatpush1.msra.mxu0 %v374
  %1732 = vmatprep.subr.mxu0 %v379
  %1733 = vmatpush1.msra.mxu0 %v378
  %1734 = vmatprep.subr.mxu0 %v383
  %1735 = vmatpush1.msra.mxu0 %v382
  %1736 = vmatprep.subr.mxu0 %v387
  %1737 = vmatpush1.msra.mxu0 %v386
  %1738 = vmatprep.subr.mxu0 %v391
  %1739 = vmatpush1.msra.mxu0 %v390
  %1740 = vmatprep.subr.mxu0 %v395
  %1741 = vmatpush1.msra.mxu0 %v394
  %1742 = vmatprep.subr.mxu0 %v399
  %1743 = vmatpush1.msra.mxu0 %v398
  %1744 = vmatprep.subr.mxu0 %v403
  %1745 = vmatpush1.msra.mxu0 %v402
  %1746 = vmatprep.subr.mxu0 %v407
  %1747 = vmatpush1.msra.mxu0 %v406
  %1748 = vmatprep.subr.mxu0 %v411
  %1749 = vmatpush1.msra.mxu0 %v410
  %1750 = vmatprep.subr.mxu0 0.0
  %1751 = vmatpush1.msra.mxu0 0.0
  %1752 = vmatprep.subr.mxu0 0.0
  %1753 = vmatpush1.msra.mxu0 0.0
  %1754 = vmatprep.subr.mxu0 0.0
  %1755 = vmatpush1.msra.mxu0 0.0
  %1756 = vmatprep.subr.mxu0 0.0
  %1757 = vmatpush1.msra.mxu0 0.0
  %1758 = vmatprep.subr.mxu0 0.0
  %1759 = vmatpush1.msra.mxu0 0.0
  %1760 = vmatprep.subr.mxu0 0.0
  %1761 = vmatpush1.msra.mxu0 0.0
  %1762 = vmatprep.subr.mxu0 0.0
  %1763 = vmatpush1.msra.mxu0 0.0
  %1764 = vmatprep.subr.mxu0 0.0
  %1765 = vmatpush1.msra.mxu0 0.0
  %1766 = vmatprep.subr.mxu0 0.0
  %1767 = vmatpush1.msra.mxu0 0.0
  %1768 = vmatprep.subr.mxu0 0.0
  %1769 = vmatpush1.msra.mxu0 0.0
  %1770 = vmatprep.subr.mxu0 0.0
  %1771 = vmatpush1.msra.mxu0 0.0
  %1772 = vmatprep.subr.mxu0 0.0
  %1773 = vmatpush1.msra.mxu0 0.0
  %1774 = vmatprep.subr.mxu0 0.0
  %1775 = vmatpush1.msra.mxu0 0.0
  %1776 = vmatprep.subr.mxu0 0.0
  %1777 = vmatpush1.msra.mxu0 0.0
  %1778 = vmatprep.subr.mxu0 0.0
  %1779 = vmatpush1.msra.mxu0 0.0
  %1780 = vmatprep.subr.mxu0 0.0
  %1781 = vmatpush1.msra.mxu0 0.0
  %1782 = vmatprep.mubr.f32.mxu0 0.0
  %1783 = vmatmul.mubr.f32.gmra.mrb[0].mxu0 %v1709
  %v1784 = vpop.f32.mrb[0].mxu0
  %v1785 = vadd.f32 0.0, %v1784
  %v1786 = vpop.f32.mrb[0].mxu0
  %v1787 = vadd.f32 0.0, %v1786
  %1788 = vdwg.mxu0
  %1789 = vmatprep.subr.mxu0 %v353
  %1790 = vmatpush1.msra.mxu0 %v352
  %1791 = vmatprep.subr.mxu0 %v357
  %1792 = vmatpush1.msra.mxu0 %v356
  %1793 = vmatprep.subr.mxu0 %v361
  %1794 = vmatpush1.msra.mxu0 %v360
  %1795 = vmatprep.subr.mxu0 %v365
  %1796 = vmatpush1.msra.mxu0 %v364
  %1797 = vmatprep.subr.mxu0 %v369
  %1798 = vmatpush1.msra.mxu0 %v368
  %1799 = vmatprep.subr.mxu0 %v373
  %1800 = vmatpush1.msra.mxu0 %v372
  %1801 = vmatprep.subr.mxu0 %v377
  %1802 = vmatpush1.msra.mxu0 %v376
  %1803 = vmatprep.subr.mxu0 %v381
  %1804 = vmatpush1.msra.mxu0 %v380
  %1805 = vmatprep.subr.mxu0 %v385
  %1806 = vmatpush1.msra.mxu0 %v384
  %1807 = vmatprep.subr.mxu0 %v389
  %1808 = vmatpush1.msra.mxu0 %v388
  %1809 = vmatprep.subr.mxu0 %v393
  %1810 = vmatpush1.msra.mxu0 %v392
  %1811 = vmatprep.subr.mxu0 %v397
  %1812 = vmatpush1.msra.mxu0 %v396
  %1813 = vmatprep.subr.mxu0 %v401
  %1814 = vmatpush1.msra.mxu0 %v400
  %1815 = vmatprep.subr.mxu0 %v405
  %1816 = vmatpush1.msra.mxu0 %v404
  %1817 = vmatprep.subr.mxu0 %v409
  %1818 = vmatpush1.msra.mxu0 %v408
  %1819 = vmatprep.subr.mxu0 %v413
  %1820 = vmatpush1.msra.mxu0 %v412
  %1821 = vmatprep.subr.mxu0 0.0
  %1822 = vmatpush1.msra.mxu0 0.0
  %1823 = vmatprep.subr.mxu0 0.0
  %1824 = vmatpush1.msra.mxu0 0.0
  %1825 = vmatprep.subr.mxu0 0.0
  %1826 = vmatpush1.msra.mxu0 0.0
  %1827 = vmatprep.subr.mxu0 0.0
  %1828 = vmatpush1.msra.mxu0 0.0
  %1829 = vmatprep.subr.mxu0 0.0
  %1830 = vmatpush1.msra.mxu0 0.0
  %1831 = vmatprep.subr.mxu0 0.0
  %1832 = vmatpush1.msra.mxu0 0.0
  %1833 = vmatprep.subr.mxu0 0.0
  %1834 = vmatpush1.msra.mxu0 0.0
  %1835 = vmatprep.subr.mxu0 0.0
  %1836 = vmatpush1.msra.mxu0 0.0
  %1837 = vmatprep.subr.mxu0 0.0
  %1838 = vmatpush1.msra.mxu0 0.0
  %1839 = vmatprep.subr.mxu0 0.0
  %1840 = vmatpush1.msra.mxu0 0.0
  %1841 = vmatprep.subr.mxu0 0.0
  %1842 = vmatpush1.msra.mxu0 0.0
  %1843 = vmatprep.subr.mxu0 0.0
  %1844 = vmatpush1.msra.mxu0 0.0
  %1845 = vmatprep.subr.mxu0 0.0
  %1846 = vmatpush1.msra.mxu0 0.0
  %1847 = vmatprep.subr.mxu0 0.0
  %1848 = vmatpush1.msra.mxu0 0.0
  %1849 = vmatprep.subr.mxu0 0.0
  %1850 = vmatpush1.msra.mxu0 0.0
  %1851 = vmatprep.subr.mxu0 0.0
  %1852 = vmatpush1.msra.mxu0 0.0
  %1853 = vmatprep.mubr.f32.mxu0 0.0
  %1854 = vmatmul.mubr.f32.gmra.mrb[0].mxu0 %v1709
  %v1855 = vpop.f32.mrb[0].mxu0
  %v1856 = vadd.f32 0.0, %v1855
  %v1857 = vpop.f32.mrb[0].mxu0
  %v1858 = vadd.f32 0.0, %v1857
  %1859 = vdwg.mxu0
  %v1860 = vadd.f32 %v1714, %v1785
  %v1861 = vadd.f32 %v1715, %v1787
  %v1862 = vadd.f32 %v1716, %v1856
  %v1863 = vadd.f32 %v1717, %v1858
  %v1864 = vxor.u32 %v1860, 2147483648
  %v1865 = vmul.f32 %v1864, 1.442695
  %v1866 = vpow.pop %v1865
  %v1867 = vadd.f32 %v1866, 1.0
  %v1868 = vrcp.pop %v1867
  %v1869 = vmul.f32 1.0, %v1868
  %v1870 = vxor.u32 %v1861, 2147483648
  %v1871 = vmul.f32 %v1870, 1.442695
  %v1872 = vpow.pop %v1871
  %v1873 = vadd.f32 %v1872, 1.0
  %v1874 = vrcp.pop %v1873
  %v1875 = vmul.f32 1.0, %v1874
  %v1876 = vtanh.pop %v1862
  %v1877 = vxor.u32 %v1863, 2147483648
  %v1878 = vmul.f32 %v1877, 1.442695
  %v1879 = vpow.pop %v1878
  %v1880 = vadd.f32 %v1879, 1.0
  %v1881 = vrcp.pop %v1880
  %v1882 = vmul.f32 1.0, %v1881
  %v1883 = vmul.f32 %v1875, %v1710
  %v1884 = vmul.f32 %v1869, %v1876
  %v1885 = vadd.f32 %v1883, %v1884
  %v1886 = vtanh.pop %v1885
  %v1887 = vmul.f32 %v1882, %v1886
  %vm1888 = vcmp.gt.s32.totalorder %v349, 7
  %v1889 = vsel %vm1888, 1, 0
  %1890 = vset.pattern.permute.xlu0 0
  %1891 = vperm.xlu0 %1890, %v1889
  %v1892 = vpop.permute.xlu0 %1891
  %vm1893 = vcmp.eq.s32.totalorder %v1892, 1
  %v1894 = vsel %vm1893, %v1887, %v1709
  %v1895 = vsel %vm1893, %v1885, %v1710
  %1896 = vst [vmem:[%s7] sm:$0xff] %v1894
  %1897 = vst [vmem:[%s8] sm:$0xff] %v1895
  // Predicated region
  $region30: #{encoder_lstm_forward.3} parent=0 // pred_check
    _
  $region31: #{encoder_lstm_forward.3} parent=0 // pred_check_branch
    %1899 = sbr.rel (0) target = $region33
  $region32: #{encoder_lstm_forward.3} parent=0 // pred_region
    _
  $region33: #{encoder_lstm_forward.3} parent=0 // pred_fallthru
    _
  // Predicated region
  $region34: #{encoder_lstm_forward.3} parent=0 // pred_check
    _
  $region35: #{encoder_lstm_forward.3} parent=0 // pred_check_branch
    %1901 = sbr.rel (0) target = $region37
  $region36: #{encoder_lstm_forward.3} parent=0 // pred_region
    _
  $region37: #{encoder_lstm_forward.3} parent=0 // pred_fallthru
    _
  // Predicated region
  $region38: #{encoder_lstm_forward.3} parent=0 // pred_check
    _
  $region39: #{encoder_lstm_forward.3} parent=0 // pred_check_branch
    %1903 = sbr.rel (0) target = $region41
  $region40: #{encoder_lstm_forward.3} parent=0 // pred_region
    _
  $region41: #{encoder_lstm_forward.3} parent=0 // pred_fallthru
    _
  // Predicated region
  $region42: #{encoder_lstm_forward.3} parent=0 // pred_check
    _
  $region43: #{encoder_lstm_forward.3} parent=0 // pred_check_branch
    %1905 = sbr.rel (0) target = $region45
  $region44: #{encoder_lstm_forward.3} parent=0 // pred_region
    _
  $region45: #{encoder_lstm_forward.3} parent=0 // pred_fallthru
    _

</llo_original>
